<compile_context>
chip_gen: v7x
topology: tpu7x:2x2x1
jax: 0.10.0
libtpu: 0.0.40
codegen_flags: <defaults>
</compile_context>

<pallas_src>
import functools

import jax
import jax.numpy as jnp
from jax import lax
from jax.experimental import pallas as pl
from jax.experimental.pallas import tpu as pltpu


def _transformer_block_kernel(
    x_ref,                       # (N, DIM)   input tokens for this sequence (f32)
    ln1_g_ref, ln1_b_ref,        # (1, DIM)   f32
    wqkv_ref,                    # (DIM, 3*DIM)  bf16
    wout_ref, bout_ref,          # (DIM, DIM) bf16, (1, DIM) f32
    ln2_g_ref, ln2_b_ref,        # (1, DIM)   f32
    wff1_ref, bff1_ref,          # (DIM, MLP) bf16, (1, MLP) f32
    wff2_ref, bff2_ref,          # (MLP, DIM) bf16, (1, DIM) f32
    o_ref,                       # (N, DIM)
    x_scr,                       # VMEM (N, DIM) f32 : activation carried across depth steps
    attn_scr,                    # VMEM (N, DIM) f32 : head-major attention output staging
    *, dim, heads, eps,
):
    l = pl.program_id(1)                 # depth step (grid axis 1, "arbitrary")
    d = dim // heads
    scale = dim ** (-0.5)                # matches the PyTorch module: self.scale = dim ** (-0.5)

    @pl.when(l == 0)
    def _():                             # new sequence: load the input activation once
        x_scr[...] = x_ref[...].astype(jnp.float32)

    x = x_scr[...]                       # (N, DIM) f32

    def layernorm(t, g_ref, b_ref):      # f32 statistics
        mu = jnp.mean(t, axis=-1, keepdims=True)
        xc = t - mu
        var = jnp.mean(xc * xc, axis=-1, keepdims=True)
        return xc * lax.rsqrt(var + eps) * g_ref[...] + b_ref[...]

    # -------- PreNorm + Attention (the module has NO residual around attention) --------
    h = layernorm(x, ln1_g_ref, ln1_b_ref).astype(jnp.bfloat16)
    qkv = jnp.dot(h, wqkv_ref[...], preferred_element_type=jnp.float32)   # (N, 3*DIM) f32

    q_all = qkv[:, 0 * dim:1 * dim] * scale   # pre-scale q in f32 (cheaper than scaling (N,N) dots)
    k_all = qkv[:, 1 * dim:2 * dim]
    v_all = qkv[:, 2 * dim:3 * dim]

    # TODO(synk): for realistic head_dim / seq lengths use a lane-aligned (B*heads, N, d) layout
    #             and flash-style online softmax over KV tiles; at toy shapes the (N, N) scores
    #             trivially fit VMEM.
    for hh in range(heads):                   # static unroll (heads is small)
        qh = q_all[:, hh * d:(hh + 1) * d].astype(jnp.bfloat16)     # (N, d)
        kh = k_all[:, hh * d:(hh + 1) * d].astype(jnp.bfloat16)
        vh = v_all[:, hh * d:(hh + 1) * d].astype(jnp.bfloat16)

        # q k^T without an explicit transpose (contract last dim of both operands).
        dots = lax.dot_general(qh, kh, (((1,), (1,)), ((), ())),
                               preferred_element_type=jnp.float32)   # (N, N) f32
        mx = jnp.max(dots, axis=-1, keepdims=True)
        p = jnp.exp(dots - mx)
        attn = p / jnp.sum(p, axis=-1, keepdims=True)                # exact softmax (f32)

        oh = jnp.dot(attn.astype(jnp.bfloat16), vh,
                     preferred_element_type=jnp.float32)             # (N, d) f32
        attn_scr[:, hh * d:(hh + 1) * d] = oh     # stage head output at its lane offset

    # ONE out-projection GEMM with full contraction K = DIM (instead of `heads` K=d GEMMs).
    out_heads = attn_scr[...].astype(jnp.bfloat16)                   # (N, DIM) head-major
    x = jnp.dot(out_heads, wout_ref[...],
                preferred_element_type=jnp.float32) + bout_ref[...]
    # Dropout after the out-projection = identity in eval mode.

    # -------- Residual(PreNorm(FeedForward)) --------
    h = layernorm(x, ln2_g_ref, ln2_b_ref).astype(jnp.bfloat16)
    ff = jnp.dot(h, wff1_ref[...], preferred_element_type=jnp.float32) + bff1_ref[...]
    ff = jnp.maximum(ff, 0.0).astype(jnp.bfloat16)
    x = jnp.dot(ff, wff2_ref[...], preferred_element_type=jnp.float32) + bff2_ref[...] + x

    x_scr[...] = x                        # carry to the next depth step

    @pl.when(l == pl.num_programs(1) - 1)
    def _():
        o_ref[...] = x.astype(o_ref.dtype)


def transformer_block_forward(x, params, *, heads, eps=1e-5):
    """x: (B, N, DIM).  params: dict of depth-stacked f32 weights (see init_params)."""
    B, N, DIM = x.shape
    assert DIM % heads == 0
    depth = params["w_qkv"].shape[0]
    mlp_dim = params["w_ff1"].shape[-1]
    bf16, f32 = jnp.bfloat16, jnp.float32

    # bf16 weight matrices: native MXU rate + half the HBM->VMEM DMA bytes.
    w_qkv = params["w_qkv"].astype(bf16)
    w_out = params["w_out"].astype(bf16)
    w_ff1 = params["w_ff1"].astype(bf16)
    w_ff2 = params["w_ff2"].astype(bf16)
    # Per-layer vectors reshaped to (depth, 1, X): each per-layer block's last two dims then
    # equal the full array dims, trivially satisfying the (8,128) BlockSpec rule.
    ln1_g = params["ln1_g"].reshape(depth, 1, DIM).astype(f32)
    ln1_b = params["ln1_b"].reshape(depth, 1, DIM).astype(f32)
    ln2_g = params["ln2_g"].reshape(depth, 1, DIM).astype(f32)
    ln2_b = params["ln2_b"].reshape(depth, 1, DIM).astype(f32)
    b_out = params["b_out"].reshape(depth, 1, DIM).astype(f32)
    b_ff1 = params["b_ff1"].reshape(depth, 1, mlp_dim).astype(f32)
    b_ff2 = params["b_ff2"].reshape(depth, 1, DIM).astype(f32)

    kernel = functools.partial(_transformer_block_kernel, dim=DIM, heads=heads, eps=eps)

    def per_layer(shape):
        # Leading depth axis squeezed; the block index follows the depth grid axis only, so
        # Pallas double-buffers and prefetches layer l+1 weights under layer l compute.
        return pl.BlockSpec((None,) + shape[1:], lambda b, l: (l, 0, 0))

    per_seq = pl.BlockSpec((None, N, DIM), lambda b, l: (b, 0, 0))

    out = pl.pallas_call(
        kernel,
        out_shape=jax.ShapeDtypeStruct((B, N, DIM), x.dtype),
        grid_spec=pltpu.PrefetchScalarGridSpec(
            num_scalar_prefetch=0,
            # batch: truly data-parallel (megacore / v7x dual-TC); depth: sequential carry.
            grid=(B, depth),
            in_specs=[
                per_seq,                                  # x
                per_layer(ln1_g.shape), per_layer(ln1_b.shape),
                per_layer(w_qkv.shape),
                per_layer(w_out.shape), per_layer(b_out.shape),
                per_layer(ln2_g.shape), per_layer(ln2_b.shape),
                per_layer(w_ff1.shape), per_layer(b_ff1.shape),
                per_layer(w_ff2.shape), per_layer(b_ff2.shape),
            ],
            out_specs=per_seq,
            scratch_shapes=[
                pltpu.VMEM((N, DIM), f32),    # activation carried across depth steps
                pltpu.VMEM((N, DIM), f32),    # head-major attention output staging
            ],
        ),
        compiler_params=pltpu.CompilerParams(
            dimension_semantics=("parallel", "arbitrary"),
            vmem_limit_bytes=32 * 1024 * 1024,
        ),
    )(x.astype(f32), ln1_g, ln1_b, w_qkv, w_out, b_out,
      ln2_g, ln2_b, w_ff1, b_ff1, w_ff2, b_ff2)
    return out


def transformer_block_reference(x, params, *, heads, eps=1e-5):
    """Pure-JAX reference mirroring the PyTorch Transformer_block (mask=None, eval dropout).

    Uses the SAME bf16-operand / f32-accumulation cast structure as the kernel so the two are
    comparable at tight tolerance regardless of backend-default f32 matmul precision."""
    depth = params["w_qkv"].shape[0]
    B, N, D = x.shape
    d = D // heads
    scale = D ** (-0.5)
    bf16, f32 = jnp.bfloat16, jnp.float32

    def layernorm(t, g, b):
        mu = jnp.mean(t, axis=-1, keepdims=True)
        xc = t - mu
        var = jnp.mean(xc * xc, axis=-1, keepdims=True)
        return xc * lax.rsqrt(var + eps) * g + b

    x = x.astype(f32)
    for l in range(depth):
        # PreNorm + Attention (no residual around attention in the module)
        h = layernorm(x, params["ln1_g"][l], params["ln1_b"][l]).astype(bf16)
        qkv = jnp.einsum('bnd,de->bne', h, params["w_qkv"][l].astype(bf16),
                         preferred_element_type=f32)
        q, k, v = jnp.split(qkv, 3, axis=-1)
        q = q * scale

        def to_heads(t):  # 'b n (h d) -> b h n d'
            return t.reshape(B, N, heads, d).transpose(0, 2, 1, 3)

        q, k, v = (to_heads(t).astype(bf16) for t in (q, k, v))
        dots = jnp.einsum('bhid,bhjd->bhij', q, k, preferred_element_type=f32)
        mx = jnp.max(dots, axis=-1, keepdims=True)
        p = jnp.exp(dots - mx)
        attn = p / jnp.sum(p, axis=-1, keepdims=True)
        out = jnp.einsum('bhij,bhjd->bhid', attn.astype(bf16), v, preferred_element_type=f32)
        out = out.transpose(0, 2, 1, 3).reshape(B, N, D)   # 'b h n d -> b n (h d)'
        x = jnp.einsum('bnd,de->bne', out.astype(bf16), params["w_out"][l].astype(bf16),
                       preferred_element_type=f32) + params["b_out"][l]

        # Residual(PreNorm(FeedForward))
        h = layernorm(x, params["ln2_g"][l], params["ln2_b"][l]).astype(bf16)
        ff = jnp.einsum('bnd,dh->bnh', h, params["w_ff1"][l].astype(bf16),
                        preferred_element_type=f32) + params["b_ff1"][l]
        ff = jnp.maximum(ff, 0.0).astype(bf16)
        x = jnp.einsum('bnh,hd->bnd', ff, params["w_ff2"][l].astype(bf16),
                       preferred_element_type=f32) + params["b_ff2"][l] + x
    return x


def init_params(key, depth, dim, mlp_dim):
    ks = jax.random.split(key, 11)
    f32 = jnp.float32
    return {
        "ln1_g": 1.0 + 0.1 * jax.random.normal(ks[0], (depth, dim), f32),
        "ln1_b": 0.1 * jax.random.normal(ks[1], (depth, dim), f32),
        "w_qkv": jax.random.normal(ks[2], (depth, dim, 3 * dim), f32) * dim ** -0.5,
        "w_out": jax.random.normal(ks[3], (depth, dim, dim), f32) * dim ** -0.5,
        "b_out": 0.1 * jax.random.normal(ks[4], (depth, dim), f32),
        "ln2_g": 1.0 + 0.1 * jax.random.normal(ks[5], (depth, dim), f32),
        "ln2_b": 0.1 * jax.random.normal(ks[6], (depth, dim), f32),
        "w_ff1": jax.random.normal(ks[7], (depth, dim, mlp_dim), f32) * dim ** -0.5,
        "b_ff1": 0.1 * jax.random.normal(ks[8], (depth, mlp_dim), f32),
        "w_ff2": jax.random.normal(ks[9], (depth, mlp_dim, dim), f32) * mlp_dim ** -0.5,
        "b_ff2": 0.1 * jax.random.normal(ks[10], (depth, dim), f32),
    }


if __name__ == "__main__":
    # Small shapes consistent with the module: batch=2, seq=8, dim=32, heads=4, depth=2, mlp=64.
    B, N, DIM, HEADS, DEPTH, MLP_DIM = 2, 8, 32, 4, 2, 64

    key = jax.random.PRNGKey(0)
    kx, kp = jax.random.split(key)
    x = jax.random.normal(kx, (B, N, DIM), dtype=jnp.float32)
    params = init_params(kp, DEPTH, DIM, MLP_DIM)

    y = transformer_block_forward(x, params, heads=HEADS)
    y = jax.block_until_ready(y)
    assert y.shape == (B, N, DIM)

    y_ref = transformer_block_reference(x, params, heads=HEADS)
    err = float(jnp.max(jnp.abs(y - y_ref)))
    # Kernel and reference share the same bf16-operand / f32-accumulation structure; the only
    # remaining differences are f32 accumulation order and transcendental rounding.
    assert jnp.allclose(y, y_ref, atol=5e-3, rtol=5e-3), (
        f"mismatch vs pure-JAX reference, max_abs_err={err}")

    print("KERNEL_OK")
</pallas_src>

<mosaic_0001>
module attributes {stable_mosaic.version = 11 : i64} {
  func.func @_transformer_block_kernel(%arg0: i32, %arg1: i32, %arg2: memref<1x8x32xf32, #tpu.memory_space<vmem>>, %arg3: memref<1x1x32xf32, #tpu.memory_space<vmem>>, %arg4: memref<1x1x32xf32, #tpu.memory_space<vmem>>, %arg5: memref<1x32x96xbf16, #tpu.memory_space<vmem>>, %arg6: memref<1x32x32xbf16, #tpu.memory_space<vmem>>, %arg7: memref<1x1x32xf32, #tpu.memory_space<vmem>>, %arg8: memref<1x1x32xf32, #tpu.memory_space<vmem>>, %arg9: memref<1x1x32xf32, #tpu.memory_space<vmem>>, %arg10: memref<1x32x64xbf16, #tpu.memory_space<vmem>>, %arg11: memref<1x1x64xf32, #tpu.memory_space<vmem>>, %arg12: memref<1x64x32xbf16, #tpu.memory_space<vmem>>, %arg13: memref<1x1x32xf32, #tpu.memory_space<vmem>>, %arg14: memref<1x8x32xf32, #tpu.memory_space<vmem>>, %arg15: memref<8x32xf32, #tpu.memory_space<vmem>>, %arg16: memref<8x32xf32, #tpu.memory_space<vmem>>) attributes {dimension_semantics = [#tpu.dimension_semantics<parallel>, #tpu.dimension_semantics<arbitrary>], iteration_bounds = array<i64: 2, 2>, scalar_prefetch = 0 : i64, scratch_operands = 2 : i64, tpu.core_type = #tpu.core_type<tc>, window_params = [{transform_indices = @transform_0, window_bounds = array<i64: 1, 8, 32>}, {transform_indices = @transform_1, window_bounds = array<i64: 1, 1, 32>}, {transform_indices = @transform_2, window_bounds = array<i64: 1, 1, 32>}, {transform_indices = @transform_3, window_bounds = array<i64: 1, 32, 96>}, {transform_indices = @transform_4, window_bounds = array<i64: 1, 32, 32>}, {transform_indices = @transform_5, window_bounds = array<i64: 1, 1, 32>}, {transform_indices = @transform_6, window_bounds = array<i64: 1, 1, 32>}, {transform_indices = @transform_7, window_bounds = array<i64: 1, 1, 32>}, {transform_indices = @transform_8, window_bounds = array<i64: 1, 32, 64>}, {transform_indices = @transform_9, window_bounds = array<i64: 1, 1, 64>}, {transform_indices = @transform_10, window_bounds = array<i64: 1, 64, 32>}, {transform_indices = @transform_11, window_bounds = array<i64: 1, 1, 32>}, {transform_indices = @transform_12, window_bounds = array<i64: 1, 8, 32>}]} {
    %c0_i32 = arith.constant 0 : i32
    %0 = arith.cmpi eq, %arg1, %c0_i32 : i32
    %1 = arith.extui %0 : i1 to i32
    %c0_i32_0 = arith.constant 0 : i32
    %2 = arith.cmpi ne, %1, %c0_i32_0 : i32
    scf.if %2 {
      %c0_76 = arith.constant 0 : index
      %c0_77 = arith.constant 0 : index
      %c0_78 = arith.constant 0 : index
      %169 = vector.load %arg2[%c0_76, %c0_77, %c0_78] : memref<1x8x32xf32, #tpu.memory_space<vmem>>, vector<1x8x32xf32>
      %170 = vector.shape_cast %169 : vector<1x8x32xf32> to vector<8x32xf32>
      %c0_79 = arith.constant 0 : index
      %c0_80 = arith.constant 0 : index
      %171 = vector.load %arg15[%c0_79, %c0_80] : memref<8x32xf32, #tpu.memory_space<vmem>>, vector<8x32xf32>
      tpu.vector_store %arg15[%c0_79, %c0_80], %170 {strides = array<i32>} : memref<8x32xf32, #tpu.memory_space<vmem>>, vector<8x32xf32>,
    } else {
    }
    %c0 = arith.constant 0 : index
    %c0_1 = arith.constant 0 : index
    %3 = vector.load %arg15[%c0, %c0_1] : memref<8x32xf32, #tpu.memory_space<vmem>>, vector<8x32xf32>
    %cst = arith.constant dense<0.000000e+00> : vector<8xf32>
    %4 = vector.multi_reduction <add>, %3, %cst [1] : vector<8x32xf32> to vector<8xf32>
    %5 = vector.shape_cast %4 : vector<8xf32> to vector<8x1xf32>
    %cst_2 = arith.constant 3.200000e+01 : f32
    %6 = vector.broadcast %cst_2 : f32 to vector<8x1xf32>
    %7 = arith.divf %5, %6 : vector<8x1xf32>
    %8 = vector.broadcast %7 : vector<8x1xf32> to vector<8x32xf32>
    %9 = arith.subf %3, %8 : vector<8x32xf32>
    %10 = arith.mulf %9, %9 : vector<8x32xf32>
    %cst_3 = arith.constant dense<0.000000e+00> : vector<8xf32>
    %11 = vector.multi_reduction <add>, %10, %cst_3 [1] : vector<8x32xf32> to vector<8xf32>
    %12 = vector.shape_cast %11 : vector<8xf32> to vector<8x1xf32>
    %cst_4 = arith.constant 3.200000e+01 : f32
    %13 = vector.broadcast %cst_4 : f32 to vector<8x1xf32>
    %14 = arith.divf %12, %13 : vector<8x1xf32>
    %cst_5 = arith.constant 9.99999974E-6 : f32
    %15 = vector.broadcast %cst_5 : f32 to vector<8x1xf32>
    %16 = arith.addf %14, %15 : vector<8x1xf32>
    %17 = math.rsqrt %16 : vector<8x1xf32>
    %18 = vector.broadcast %17 : vector<8x1xf32> to vector<8x32xf32>
    %19 = arith.mulf %9, %18 : vector<8x32xf32>
    %c0_6 = arith.constant 0 : index
    %c0_7 = arith.constant 0 : index
    %c0_8 = arith.constant 0 : index
    %20 = vector.load %arg3[%c0_6, %c0_7, %c0_8] : memref<1x1x32xf32, #tpu.memory_space<vmem>>, vector<1x1x32xf32>
    %21 = vector.shape_cast %20 : vector<1x1x32xf32> to vector<1x32xf32>
    %22 = vector.broadcast %21 : vector<1x32xf32> to vector<8x32xf32>
    %23 = arith.mulf %19, %22 : vector<8x32xf32>
    %c0_9 = arith.constant 0 : index
    %c0_10 = arith.constant 0 : index
    %c0_11 = arith.constant 0 : index
    %24 = vector.load %arg4[%c0_9, %c0_10, %c0_11] : memref<1x1x32xf32, #tpu.memory_space<vmem>>, vector<1x1x32xf32>
    %25 = vector.shape_cast %24 : vector<1x1x32xf32> to vector<1x32xf32>
    %26 = vector.broadcast %25 : vector<1x32xf32> to vector<8x32xf32>
    %27 = arith.addf %23, %26 : vector<8x32xf32>
    %28 = arith.truncf %27 : vector<8x32xf32> to vector<8x32xbf16>
    %c0_12 = arith.constant 0 : index
    %c0_13 = arith.constant 0 : index
    %c0_14 = arith.constant 0 : index
    %29 = vector.load %arg5[%c0_12, %c0_13, %c0_14] : memref<1x32x96xbf16, #tpu.memory_space<vmem>>, vector<1x32x96xbf16>
    %30 = vector.shape_cast %29 : vector<1x32x96xbf16> to vector<32x96xbf16>
    %cst_15 = arith.constant dense<0.000000e+00> : vector<8x96xf32>
    %31 = tpu.matmul %28, %30, %cst_15 {dimension_numbers = #tpu.dot_dimension_numbers<[1], [0], [0], [1], [0, 0, 1, 1], [], []>} : vector<8x32xbf16>, vector<32x96xbf16>, vector<8x96xf32> -> vector<8x96xf32>
    %32 = vector.extract_strided_slice %31 {offsets = [0, 0], sizes = [8, 32], strides = [1, 1]} : vector<8x96xf32> to vector<8x32xf32>
    %cst_16 = arith.constant 0.176776692 : f32
    %33 = vector.broadcast %cst_16 : f32 to vector<8x32xf32>
    %34 = arith.mulf %32, %33 : vector<8x32xf32>
    %35 = vector.extract_strided_slice %31 {offsets = [0, 32], sizes = [8, 32], strides = [1, 1]} : vector<8x96xf32> to vector<8x32xf32>
    %36 = vector.extract_strided_slice %31 {offsets = [0, 64], sizes = [8, 32], strides = [1, 1]} : vector<8x96xf32> to vector<8x32xf32>
    %37 = vector.extract_strided_slice %34 {offsets = [0, 0], sizes = [8, 8], strides = [1, 1]} : vector<8x32xf32> to vector<8x8xf32>
    %38 = arith.truncf %37 : vector<8x8xf32> to vector<8x8xbf16>
    %39 = vector.extract_strided_slice %35 {offsets = [0, 0], sizes = [8, 8], strides = [1, 1]} : vector<8x32xf32> to vector<8x8xf32>
    %40 = arith.truncf %39 : vector<8x8xf32> to vector<8x8xbf16>
    %41 = vector.extract_strided_slice %36 {offsets = [0, 0], sizes = [8, 8], strides = [1, 1]} : vector<8x32xf32> to vector<8x8xf32>
    %42 = arith.truncf %41 : vector<8x8xf32> to vector<8x8xbf16>
    %cst_17 = arith.constant dense<0.000000e+00> : vector<8x8xf32>
    %43 = tpu.matmul %38, %40, %cst_17 {dimension_numbers = #tpu.dot_dimension_numbers<[1], [1], [0], [0], [0, 0, 1, 0], [], []>} : vector<8x8xbf16>, vector<8x8xbf16>, vector<8x8xf32> -> vector<8x8xf32>
    %cst_18 = arith.constant dense<0xFF800000> : vector<8xf32>
    %44 = vector.multi_reduction <maximumf>, %43, %cst_18 [1] : vector<8x8xf32> to vector<8xf32>
    %45 = vector.shape_cast %44 : vector<8xf32> to vector<8x1xf32>
    %46 = vector.broadcast %45 : vector<8x1xf32> to vector<8x8xf32>
    %47 = arith.subf %43, %46 : vector<8x8xf32>
    %48 = math.exp %47 : vector<8x8xf32>
    %cst_19 = arith.constant dense<0.000000e+00> : vector<8xf32>
    %49 = vector.multi_reduction <add>, %48, %cst_19 [1] : vector<8x8xf32> to vector<8xf32>
    %50 = vector.shape_cast %49 : vector<8xf32> to vector<8x1xf32>
    %51 = vector.broadcast %50 : vector<8x1xf32> to vector<8x8xf32>
    %52 = arith.divf %48, %51 : vector<8x8xf32>
    %53 = arith.truncf %52 : vector<8x8xf32> to vector<8x8xbf16>
    %cst_20 = arith.constant dense<0.000000e+00> : vector<8x8xf32>
    %54 = tpu.matmul %53, %42, %cst_20 {dimension_numbers = #tpu.dot_dimension_numbers<[1], [0], [0], [1], [0, 0, 1, 1], [], []>} : vector<8x8xbf16>, vector<8x8xbf16>, vector<8x8xf32> -> vector<8x8xf32>
    %c0_21 = arith.constant 0 : index
    %c0_22 = arith.constant 0 : index
    %55 = vector.load %arg16[%c0_21, %c0_22] : memref<8x32xf32, #tpu.memory_space<vmem>>, vector<8x8xf32>
    tpu.vector_store %arg16[%c0_21, %c0_22], %54 {strides = array<i32>} : memref<8x32xf32, #tpu.memory_space<vmem>>, vector<8x8xf32>,
    %56 = vector.extract_strided_slice %34 {offsets = [0, 8], sizes = [8, 8], strides = [1, 1]} : vector<8x32xf32> to vector<8x8xf32>
    %57 = arith.truncf %56 : vector<8x8xf32> to vector<8x8xbf16>
    %58 = vector.extract_strided_slice %35 {offsets = [0, 8], sizes = [8, 8], strides = [1, 1]} : vector<8x32xf32> to vector<8x8xf32>
    %59 = arith.truncf %58 : vector<8x8xf32> to vector<8x8xbf16>
    %60 = vector.extract_strided_slice %36 {offsets = [0, 8], sizes = [8, 8], strides = [1, 1]} : vector<8x32xf32> to vector<8x8xf32>
    %61 = arith.truncf %60 : vector<8x8xf32> to vector<8x8xbf16>
    %cst_23 = arith.constant dense<0.000000e+00> : vector<8x8xf32>
    %62 = tpu.matmul %57, %59, %cst_23 {dimension_numbers = #tpu.dot_dimension_numbers<[1], [1], [0], [0], [0, 0, 1, 0], [], []>} : vector<8x8xbf16>, vector<8x8xbf16>, vector<8x8xf32> -> vector<8x8xf32>
    %cst_24 = arith.constant dense<0xFF800000> : vector<8xf32>
    %63 = vector.multi_reduction <maximumf>, %62, %cst_24 [1] : vector<8x8xf32> to vector<8xf32>
    %64 = vector.shape_cast %63 : vector<8xf32> to vector<8x1xf32>
    %65 = vector.broadcast %64 : vector<8x1xf32> to vector<8x8xf32>
    %66 = arith.subf %62, %65 : vector<8x8xf32>
    %67 = math.exp %66 : vector<8x8xf32>
    %cst_25 = arith.constant dense<0.000000e+00> : vector<8xf32>
    %68 = vector.multi_reduction <add>, %67, %cst_25 [1] : vector<8x8xf32> to vector<8xf32>
    %69 = vector.shape_cast %68 : vector<8xf32> to vector<8x1xf32>
    %70 = vector.broadcast %69 : vector<8x1xf32> to vector<8x8xf32>
    %71 = arith.divf %67, %70 : vector<8x8xf32>
    %72 = arith.truncf %71 : vector<8x8xf32> to vector<8x8xbf16>
    %cst_26 = arith.constant dense<0.000000e+00> : vector<8x8xf32>
    %73 = tpu.matmul %72, %61, %cst_26 {dimension_numbers = #tpu.dot_dimension_numbers<[1], [0], [0], [1], [0, 0, 1, 1], [], []>} : vector<8x8xbf16>, vector<8x8xbf16>, vector<8x8xf32> -> vector<8x8xf32>
    %c0_27 = arith.constant 0 : index
    %c8 = arith.constant 8 : index
    %74 = vector.load %arg16[%c0_27, %c8] : memref<8x32xf32, #tpu.memory_space<vmem>>, vector<8x8xf32>
    tpu.vector_store %arg16[%c0_27, %c8], %73 {strides = array<i32>} : memref<8x32xf32, #tpu.memory_space<vmem>>, vector<8x8xf32>,
    %75 = vector.extract_strided_slice %34 {offsets = [0, 16], sizes = [8, 8], strides = [1, 1]} : vector<8x32xf32> to vector<8x8xf32>
    %76 = arith.truncf %75 : vector<8x8xf32> to vector<8x8xbf16>
    %77 = vector.extract_strided_slice %35 {offsets = [0, 16], sizes = [8, 8], strides = [1, 1]} : vector<8x32xf32> to vector<8x8xf32>
    %78 = arith.truncf %77 : vector<8x8xf32> to vector<8x8xbf16>
    %79 = vector.extract_strided_slice %36 {offsets = [0, 16], sizes = [8, 8], strides = [1, 1]} : vector<8x32xf32> to vector<8x8xf32>
    %80 = arith.truncf %79 : vector<8x8xf32> to vector<8x8xbf16>
    %cst_28 = arith.constant dense<0.000000e+00> : vector<8x8xf32>
    %81 = tpu.matmul %76, %78, %cst_28 {dimension_numbers = #tpu.dot_dimension_numbers<[1], [1], [0], [0], [0, 0, 1, 0], [], []>} : vector<8x8xbf16>, vector<8x8xbf16>, vector<8x8xf32> -> vector<8x8xf32>
    %cst_29 = arith.constant dense<0xFF800000> : vector<8xf32>
    %82 = vector.multi_reduction <maximumf>, %81, %cst_29 [1] : vector<8x8xf32> to vector<8xf32>
    %83 = vector.shape_cast %82 : vector<8xf32> to vector<8x1xf32>
    %84 = vector.broadcast %83 : vector<8x1xf32> to vector<8x8xf32>
    %85 = arith.subf %81, %84 : vector<8x8xf32>
    %86 = math.exp %85 : vector<8x8xf32>
    %cst_30 = arith.constant dense<0.000000e+00> : vector<8xf32>
    %87 = vector.multi_reduction <add>, %86, %cst_30 [1] : vector<8x8xf32> to vector<8xf32>
    %88 = vector.shape_cast %87 : vector<8xf32> to vector<8x1xf32>
    %89 = vector.broadcast %88 : vector<8x1xf32> to vector<8x8xf32>
    %90 = arith.divf %86, %89 : vector<8x8xf32>
    %91 = arith.truncf %90 : vector<8x8xf32> to vector<8x8xbf16>
    %cst_31 = arith.constant dense<0.000000e+00> : vector<8x8xf32>
    %92 = tpu.matmul %91, %80, %cst_31 {dimension_numbers = #tpu.dot_dimension_numbers<[1], [0], [0], [1], [0, 0, 1, 1], [], []>} : vector<8x8xbf16>, vector<8x8xbf16>, vector<8x8xf32> -> vector<8x8xf32>
    %c0_32 = arith.constant 0 : index
    %c16 = arith.constant 16 : index
    %93 = vector.load %arg16[%c0_32, %c16] : memref<8x32xf32, #tpu.memory_space<vmem>>, vector<8x8xf32>
    tpu.vector_store %arg16[%c0_32, %c16], %92 {strides = array<i32>} : memref<8x32xf32, #tpu.memory_space<vmem>>, vector<8x8xf32>,
    %94 = vector.extract_strided_slice %34 {offsets = [0, 24], sizes = [8, 8], strides = [1, 1]} : vector<8x32xf32> to vector<8x8xf32>
    %95 = arith.truncf %94 : vector<8x8xf32> to vector<8x8xbf16>
    %96 = vector.extract_strided_slice %35 {offsets = [0, 24], sizes = [8, 8], strides = [1, 1]} : vector<8x32xf32> to vector<8x8xf32>
    %97 = arith.truncf %96 : vector<8x8xf32> to vector<8x8xbf16>
    %98 = vector.extract_strided_slice %36 {offsets = [0, 24], sizes = [8, 8], strides = [1, 1]} : vector<8x32xf32> to vector<8x8xf32>
    %99 = arith.truncf %98 : vector<8x8xf32> to vector<8x8xbf16>
    %cst_33 = arith.constant dense<0.000000e+00> : vector<8x8xf32>
    %100 = tpu.matmul %95, %97, %cst_33 {dimension_numbers = #tpu.dot_dimension_numbers<[1], [1], [0], [0], [0, 0, 1, 0], [], []>} : vector<8x8xbf16>, vector<8x8xbf16>, vector<8x8xf32> -> vector<8x8xf32>
    %cst_34 = arith.constant dense<0xFF800000> : vector<8xf32>
    %101 = vector.multi_reduction <maximumf>, %100, %cst_34 [1] : vector<8x8xf32> to vector<8xf32>
    %102 = vector.shape_cast %101 : vector<8xf32> to vector<8x1xf32>
    %103 = vector.broadcast %102 : vector<8x1xf32> to vector<8x8xf32>
    %104 = arith.subf %100, %103 : vector<8x8xf32>
    %105 = math.exp %104 : vector<8x8xf32>
    %cst_35 = arith.constant dense<0.000000e+00> : vector<8xf32>
    %106 = vector.multi_reduction <add>, %105, %cst_35 [1] : vector<8x8xf32> to vector<8xf32>
    %107 = vector.shape_cast %106 : vector<8xf32> to vector<8x1xf32>
    %108 = vector.broadcast %107 : vector<8x1xf32> to vector<8x8xf32>
    %109 = arith.divf %105, %108 : vector<8x8xf32>
    %110 = arith.truncf %109 : vector<8x8xf32> to vector<8x8xbf16>
    %cst_36 = arith.constant dense<0.000000e+00> : vector<8x8xf32>
    %111 = tpu.matmul %110, %99, %cst_36 {dimension_numbers = #tpu.dot_dimension_numbers<[1], [0], [0], [1], [0, 0, 1, 1], [], []>} : vector<8x8xbf16>, vector<8x8xbf16>, vector<8x8xf32> -> vector<8x8xf32>
    %c0_37 = arith.constant 0 : index
    %c24 = arith.constant 24 : index
    %112 = vector.load %arg16[%c0_37, %c24] : memref<8x32xf32, #tpu.memory_space<vmem>>, vector<8x8xf32>
    tpu.vector_store %arg16[%c0_37, %c24], %111 {strides = array<i32>} : memref<8x32xf32, #tpu.memory_space<vmem>>, vector<8x8xf32>,
    %c0_38 = arith.constant 0 : index
    %c0_39 = arith.constant 0 : index
    %113 = vector.load %arg16[%c0_38, %c0_39] : memref<8x32xf32, #tpu.memory_space<vmem>>, vector<8x32xf32>
    %114 = arith.truncf %113 : vector<8x32xf32> to vector<8x32xbf16>
    %c0_40 = arith.constant 0 : index
    %c0_41 = arith.constant 0 : index
    %c0_42 = arith.constant 0 : index
    %115 = vector.load %arg6[%c0_40, %c0_41, %c0_42] : memref<1x32x32xbf16, #tpu.memory_space<vmem>>, vector<1x32x32xbf16>
    %116 = vector.shape_cast %115 : vector<1x32x32xbf16> to vector<32x32xbf16>
    %cst_43 = arith.constant dense<0.000000e+00> : vector<8x32xf32>
    %117 = tpu.matmul %114, %116, %cst_43 {dimension_numbers = #tpu.dot_dimension_numbers<[1], [0], [0], [1], [0, 0, 1, 1], [], []>} : vector<8x32xbf16>, vector<32x32xbf16>, vector<8x32xf32> -> vector<8x32xf32>
    %c0_44 = arith.constant 0 : index
    %c0_45 = arith.constant 0 : index
    %c0_46 = arith.constant 0 : index
    %118 = vector.load %arg7[%c0_44, %c0_45, %c0_46] : memref<1x1x32xf32, #tpu.memory_space<vmem>>, vector<1x1x32xf32>
    %119 = vector.shape_cast %118 : vector<1x1x32xf32> to vector<1x32xf32>
    %120 = vector.broadcast %119 : vector<1x32xf32> to vector<8x32xf32>
    %121 = arith.addf %117, %120 : vector<8x32xf32>
    %cst_47 = arith.constant dense<0.000000e+00> : vector<8xf32>
    %122 = vector.multi_reduction <add>, %121, %cst_47 [1] : vector<8x32xf32> to vector<8xf32>
    %123 = vector.shape_cast %122 : vector<8xf32> to vector<8x1xf32>
    %cst_48 = arith.constant 3.200000e+01 : f32
    %124 = vector.broadcast %cst_48 : f32 to vector<8x1xf32>
    %125 = arith.divf %123, %124 : vector<8x1xf32>
    %126 = vector.broadcast %125 : vector<8x1xf32> to vector<8x32xf32>
    %127 = arith.subf %121, %126 : vector<8x32xf32>
    %128 = arith.mulf %127, %127 : vector<8x32xf32>
    %cst_49 = arith.constant dense<0.000000e+00> : vector<8xf32>
    %129 = vector.multi_reduction <add>, %128, %cst_49 [1] : vector<8x32xf32> to vector<8xf32>
    %130 = vector.shape_cast %129 : vector<8xf32> to vector<8x1xf32>
    %cst_50 = arith.constant 3.200000e+01 : f32
    %131 = vector.broadcast %cst_50 : f32 to vector<8x1xf32>
    %132 = arith.divf %130, %131 : vector<8x1xf32>
    %cst_51 = arith.constant 9.99999974E-6 : f32
    %133 = vector.broadcast %cst_51 : f32 to vector<8x1xf32>
    %134 = arith.addf %132, %133 : vector<8x1xf32>
    %135 = math.rsqrt %134 : vector<8x1xf32>
    %136 = vector.broadcast %135 : vector<8x1xf32> to vector<8x32xf32>
    %137 = arith.mulf %127, %136 : vector<8x32xf32>
    %c0_52 = arith.constant 0 : index
    %c0_53 = arith.constant 0 : index
    %c0_54 = arith.constant 0 : index
    %138 = vector.load %arg8[%c0_52, %c0_53, %c0_54] : memref<1x1x32xf32, #tpu.memory_space<vmem>>, vector<1x1x32xf32>
    %139 = vector.shape_cast %138 : vector<1x1x32xf32> to vector<1x32xf32>
    %140 = vector.broadcast %139 : vector<1x32xf32> to vector<8x32xf32>
    %141 = arith.mulf %137, %140 : vector<8x32xf32>
    %c0_55 = arith.constant 0 : index
    %c0_56 = arith.constant 0 : index
    %c0_57 = arith.constant 0 : index
    %142 = vector.load %arg9[%c0_55, %c0_56, %c0_57] : memref<1x1x32xf32, #tpu.memory_space<vmem>>, vector<1x1x32xf32>
    %143 = vector.shape_cast %142 : vector<1x1x32xf32> to vector<1x32xf32>
    %144 = vector.broadcast %143 : vector<1x32xf32> to vector<8x32xf32>
    %145 = arith.addf %141, %144 : vector<8x32xf32>
    %146 = arith.truncf %145 : vector<8x32xf32> to vector<8x32xbf16>
    %c0_58 = arith.constant 0 : index
    %c0_59 = arith.constant 0 : index
    %c0_60 = arith.constant 0 : index
    %147 = vector.load %arg10[%c0_58, %c0_59, %c0_60] : memref<1x32x64xbf16, #tpu.memory_space<vmem>>, vector<1x32x64xbf16>
    %148 = vector.shape_cast %147 : vector<1x32x64xbf16> to vector<32x64xbf16>
    %cst_61 = arith.constant dense<0.000000e+00> : vector<8x64xf32>
    %149 = tpu.matmul %146, %148, %cst_61 {dimension_numbers = #tpu.dot_dimension_numbers<[1], [0], [0], [1], [0, 0, 1, 1], [], []>} : vector<8x32xbf16>, vector<32x64xbf16>, vector<8x64xf32> -> vector<8x64xf32>
    %c0_62 = arith.constant 0 : index
    %c0_63 = arith.constant 0 : index
    %c0_64 = arith.constant 0 : index
    %150 = vector.load %arg11[%c0_62, %c0_63, %c0_64] : memref<1x1x64xf32, #tpu.memory_space<vmem>>, vector<1x1x64xf32>
    %151 = vector.shape_cast %150 : vector<1x1x64xf32> to vector<1x64xf32>
    %152 = vector.broadcast %151 : vector<1x64xf32> to vector<8x64xf32>
    %153 = arith.addf %149, %152 : vector<8x64xf32>
    %cst_65 = arith.constant 0.000000e+00 : f32
    %154 = vector.broadcast %cst_65 : f32 to vector<8x64xf32>
    %155 = arith.maximumf %153, %154 : vector<8x64xf32>
    %156 = arith.truncf %155 : vector<8x64xf32> to vector<8x64xbf16>
    %c0_66 = arith.constant 0 : index
    %c0_67 = arith.constant 0 : index
    %c0_68 = arith.constant 0 : index
    %157 = vector.load %arg12[%c0_66, %c0_67, %c0_68] : memref<1x64x32xbf16, #tpu.memory_space<vmem>>, vector<1x64x32xbf16>
    %158 = vector.shape_cast %157 : vector<1x64x32xbf16> to vector<64x32xbf16>
    %cst_69 = arith.constant dense<0.000000e+00> : vector<8x32xf32>
    %159 = tpu.matmul %156, %158, %cst_69 {dimension_numbers = #tpu.dot_dimension_numbers<[1], [0], [0], [1], [0, 0, 1, 1], [], []>} : vector<8x64xbf16>, vector<64x32xbf16>, vector<8x32xf32> -> vector<8x32xf32>
    %c0_70 = arith.constant 0 : index
    %c0_71 = arith.constant 0 : index
    %c0_72 = arith.constant 0 : index
    %160 = vector.load %arg13[%c0_70, %c0_71, %c0_72] : memref<1x1x32xf32, #tpu.memory_space<vmem>>, vector<1x1x32xf32>
    %161 = vector.shape_cast %160 : vector<1x1x32xf32> to vector<1x32xf32>
    %162 = vector.broadcast %161 : vector<1x32xf32> to vector<8x32xf32>
    %163 = arith.addf %159, %162 : vector<8x32xf32>
    %164 = arith.addf %163, %121 : vector<8x32xf32>
    %c0_73 = arith.constant 0 : index
    %c0_74 = arith.constant 0 : index
    %165 = vector.load %arg15[%c0_73, %c0_74] : memref<8x32xf32, #tpu.memory_space<vmem>>, vector<8x32xf32>
    tpu.vector_store %arg15[%c0_73, %c0_74], %164 {strides = array<i32>} : memref<8x32xf32, #tpu.memory_space<vmem>>, vector<8x32xf32>,
    %c1_i32 = arith.constant 1 : i32
    %166 = arith.cmpi eq, %arg1, %c1_i32 : i32
    %167 = arith.extui %166 : i1 to i32
    %c0_i32_75 = arith.constant 0 : i32
    %168 = arith.cmpi ne, %167, %c0_i32_75 : i32
    scf.if %168 {
      %c0_76 = arith.constant 0 : index
      %c0_77 = arith.constant 0 : index
      %c0_78 = arith.constant 0 : index
      %169 = vector.load %arg14[%c0_76, %c0_77, %c0_78] : memref<1x8x32xf32, #tpu.memory_space<vmem>>, vector<1x8x32xf32>
      %170 = vector.shape_cast %169 : vector<1x8x32xf32> to vector<8x32xf32>
      %171 = vector.shape_cast %164 : vector<8x32xf32> to vector<1x8x32xf32>
      tpu.vector_store %arg14[%c0_76, %c0_77, %c0_78], %171 {strides = array<i32>} : memref<1x8x32xf32, #tpu.memory_space<vmem>>, vector<1x8x32xf32>,
    } else {
    }
    return
  }
  func.func @transform_0(%arg0: i32, %arg1: i32) -> (i32, i32, i32) {
    %c0_i32 = arith.constant 0 : i32
    %c0_i32_0 = arith.constant 0 : i32
    %c0_i32_1 = arith.constant 0 : i32
    return %arg0, %c0_i32, %c0_i32_0 : i32, i32, i32
  }
  func.func @transform_1(%arg0: i32, %arg1: i32) -> (i32, i32, i32) {
    %c0_i32 = arith.constant 0 : i32
    %c0_i32_0 = arith.constant 0 : i32
    %c0_i32_1 = arith.constant 0 : i32
    return %arg1, %c0_i32, %c0_i32_0 : i32, i32, i32
  }
  func.func @transform_2(%arg0: i32, %arg1: i32) -> (i32, i32, i32) {
    %c0_i32 = arith.constant 0 : i32
    %c0_i32_0 = arith.constant 0 : i32
    %c0_i32_1 = arith.constant 0 : i32
    return %arg1, %c0_i32, %c0_i32_0 : i32, i32, i32
  }
  func.func @transform_3(%arg0: i32, %arg1: i32) -> (i32, i32, i32) {
    %c0_i32 = arith.constant 0 : i32
    %c0_i32_0 = arith.constant 0 : i32
    %c0_i32_1 = arith.constant 0 : i32
    return %arg1, %c0_i32, %c0_i32_0 : i32, i32, i32
  }
  func.func @transform_4(%arg0: i32, %arg1: i32) -> (i32, i32, i32) {
    %c0_i32 = arith.constant 0 : i32
    %c0_i32_0 = arith.constant 0 : i32
    %c0_i32_1 = arith.constant 0 : i32
    return %arg1, %c0_i32, %c0_i32_0 : i32, i32, i32
  }
  func.func @transform_5(%arg0: i32, %arg1: i32) -> (i32, i32, i32) {
    %c0_i32 = arith.constant 0 : i32
    %c0_i32_0 = arith.constant 0 : i32
    %c0_i32_1 = arith.constant 0 : i32
    return %arg1, %c0_i32, %c0_i32_0 : i32, i32, i32
  }
  func.func @transform_6(%arg0: i32, %arg1: i32) -> (i32, i32, i32) {
    %c0_i32 = arith.constant 0 : i32
    %c0_i32_0 = arith.constant 0 : i32
    %c0_i32_1 = arith.constant 0 : i32
    return %arg1, %c0_i32, %c0_i32_0 : i32, i32, i32
  }
  func.func @transform_7(%arg0: i32, %arg1: i32) -> (i32, i32, i32) {
    %c0_i32 = arith.constant 0 : i32
    %c0_i32_0 = arith.constant 0 : i32
    %c0_i32_1 = arith.constant 0 : i32
    return %arg1, %c0_i32, %c0_i32_0 : i32, i32, i32
  }
  func.func @transform_8(%arg0: i32, %arg1: i32) -> (i32, i32, i32) {
    %c0_i32 = arith.constant 0 : i32
    %c0_i32_0 = arith.constant 0 : i32
    %c0_i32_1 = arith.constant 0 : i32
    return %arg1, %c0_i32, %c0_i32_0 : i32, i32, i32
  }
  func.func @transform_9(%arg0: i32, %arg1: i32) -> (i32, i32, i32) {
    %c0_i32 = arith.constant 0 : i32
    %c0_i32_0 = arith.constant 0 : i32
    %c0_i32_1 = arith.constant 0 : i32
    return %arg1, %c0_i32, %c0_i32_0 : i32, i32, i32
  }
  func.func @transform_10(%arg0: i32, %arg1: i32) -> (i32, i32, i32) {
    %c0_i32 = arith.constant 0 : i32
    %c0_i32_0 = arith.constant 0 : i32
    %c0_i32_1 = arith.constant 0 : i32
    return %arg1, %c0_i32, %c0_i32_0 : i32, i32, i32
  }
  func.func @transform_11(%arg0: i32, %arg1: i32) -> (i32, i32, i32) {
    %c0_i32 = arith.constant 0 : i32
    %c0_i32_0 = arith.constant 0 : i32
    %c0_i32_1 = arith.constant 0 : i32
    return %arg1, %c0_i32, %c0_i32_0 : i32, i32, i32
  }
  func.func @transform_12(%arg0: i32, %arg1: i32) -> (i32, i32, i32) {
    %c0_i32 = arith.constant 0 : i32
    %c0_i32_0 = arith.constant 0 : i32
    %c0_i32_1 = arith.constant 0 : i32
    return %arg0, %c0_i32, %c0_i32_0 : i32, i32, i32
  }
}

</mosaic_0001>

<llo_original>
// kernel: tpu_custom_call.1
$region0: #{tpu_custom_call.1}
  #allocation0 [shape = 'u32[]', space=smem, size = 0x4, offset = 0x4, fixed_abs, tag = 'smem constant byte address 0x4 - core index']
  #allocation1 [shape = 'u32[144,128]{1,0:T(1,128)}', space=vmem, size = 0x12000, scoped, tag = 'internal scratch']
  #allocation2 [shape = 'f32[8,32]{1,0:T(8,128)}', space=vmem, size = 0x1000, scoped, tag = 'scratch operand']
  #allocation3 [shape = 'f32[8,32]{1,0:T(8,128)}', space=vmem, size = 0x1000, scoped, tag = 'scratch operand']
  %s0 = inlined_call_operand.hbm [shape: f32[2,8,32], index: 0, kind: input, shape index: {}]
  %s1 = inlined_call_operand.vmem [shape: f32[2,1,32], index: 1, kind: input, shape index: {}]
  %s2 = inlined_call_operand.vmem [shape: f32[2,1,32], index: 2, kind: input, shape index: {}]
  %s3 = inlined_call_operand.vmem [shape: bf16[2,32,96], index: 3, kind: input, shape index: {}]
  %s4 = inlined_call_operand.vmem [shape: bf16[2,32,32], index: 4, kind: input, shape index: {}]
  %s5 = inlined_call_operand.hbm [shape: f32[2,1,32], index: 5, kind: input, shape index: {}]
  %s6 = inlined_call_operand.hbm [shape: f32[2,1,32], index: 6, kind: input, shape index: {}]
  %s7 = inlined_call_operand.hbm [shape: f32[2,1,32], index: 7, kind: input, shape index: {}]
  %s8 = inlined_call_operand.vmem [shape: bf16[2,32,64], index: 8, kind: input, shape index: {}]
  %s9 = inlined_call_operand.hbm [shape: f32[2,1,64], index: 9, kind: input, shape index: {}]
  %s10 = inlined_call_operand.vmem [shape: bf16[2,64,32], index: 10, kind: input, shape index: {}]
  %s11 = inlined_call_operand.vmem [shape: f32[2,1,32], index: 11, kind: input, shape index: {}]
  %s12 = inlined_call_operand.hbm [shape: f32[2,8,32], index: 12, kind: output, shape index: {}]
  %s13 = sld [smem:[#allocation0]]
  $region109: #{tpu_custom_call.1} parent=0
    _
  %s15 = ssub.s32 1, %s13
  %s16 = scalar_select 0, %s15, %s13
  $region1: #{tpu_custom_call.1} parent=0
    #allocation4 [shape = 'u8[8192]{0}', space=vmem, size = 0x2000, scoped, tag = 'input window, operand 0']
    #allocation5 [shape = 's32[2]{0}', space=sflag, size = 0x8, scoped, tag = 'scoped memory for tpu_custom_call.1']
    #allocation6 [shape = 's32[2]{0}', space=sflag, size = 0x8, scoped, tag = 'scoped memory for tpu_custom_call.1']
    #allocation7 [shape = 'u8[1024]{0}', space=vmem, size = 0x400, scoped, tag = 'input window, operand 5']
    #allocation8 [shape = 's32[2]{0}', space=sflag, size = 0x8, scoped, tag = 'scoped memory for tpu_custom_call.1']
    #allocation9 [shape = 'u8[1024]{0}', space=vmem, size = 0x400, scoped, tag = 'input window, operand 6']
    #allocation10 [shape = 'u8[1024]{0}', space=vmem, size = 0x400, scoped, tag = 'input window, operand 7']
    #allocation11 [shape = 's32[2]{0}', space=sflag, size = 0x8, scoped, tag = 'scoped memory for tpu_custom_call.1']
    #allocation12 [shape = 'u8[1024]{0}', space=vmem, size = 0x400, scoped, tag = 'input window, operand 9']
    #allocation13 [shape = 'u8[8192]{0}', space=vmem, size = 0x2000, scoped, tag = 'output window, operand 0']
    %17 = vsyncpa [#allocation5], 0
    %s18 = scalar_lea.sflag [#allocation5], 1
    %19 = vsyncpa %s18, 0
    %20 = vsyncpa [#allocation8], 0
    %s21 = scalar_lea.sflag [#allocation8], 1
    %22 = vsyncpa %s21, 0
    %23 = vsyncpa [#allocation11], 0
    %s24 = scalar_lea.sflag [#allocation11], 1
    %25 = vsyncpa %s24, 0
    %26 = vsyncpa [#allocation6], 0
    %s27 = scalar_lea.sflag [#allocation6], 1
    %28 = vsyncpa %s27, 0
    loop: start=0, step=1, limit=6
    $region2: #{tpu_custom_call.1} parent=1 // loop_pre_header
      _
    $region3: #{tpu_custom_call.1} parent=1 // loop_header
      %s30 = sphi 0, %s34
      %p31 = scmp.ge.s32.totalorder %s30, 6
      %s37 = sphi 0, %s49
      %s38 = sphi 0, %s45
      %s39 = sphi 0, %s37
      %s40 = sphi 0, %s38
      %s41 = sphi 0, %s39
      %s42 = sphi 0, %s40
      %s52 = sphi 0, %s54
      %s55 = sphi 0, %s52
      %s56 = sphi 0, %s55
      %s72 = sphi 0, %s56
      %s78 = sphi 0, %s80
      %s81 = sphi 0, %s78
      %s82 = sphi 0, %s81
      %s98 = sphi 0, %s82
      %s104 = sphi 0, %s106
      %s107 = sphi 0, %s104
      %s108 = sphi 0, %s107
      %s124 = sphi 0, %s108
      %s130 = sphi 0, %s132
      %s133 = sphi 0, %s130
      %s134 = sphi 0, %s133
      %s150 = sphi 0, %s134
      %s156 = sphi 0, %s158
      %s159 = sphi 0, %s156
      %s160 = sphi 0, %s159
      %s176 = sphi 0, %s160
      %s182 = sphi 0, %s184
      %s185 = sphi 0, %s182
      %s186 = sphi 0, %s185
      %s202 = sphi 0, %s186
      %s208 = sphi 0, %s210
      %s211 = sphi 0, %s208
      %s212 = sphi 0, %s211
      %s228 = sphi 0, %s212
      %s234 = sphi 0, %s236
      %s237 = sphi 0, %s234
      %s238 = sphi 0, %s237
      %s254 = sphi 0, %s238
      %s260 = sphi 0, %s262
      %s263 = sphi 0, %s260
      %s264 = sphi 0, %s263
      %s280 = sphi 0, %s264
      %s286 = sphi 0, %s288
      %s289 = sphi 0, %s286
      %s290 = sphi 0, %s289
      %s306 = sphi 0, %s290
      %s312 = sphi 0, %s314
      %s315 = sphi 0, %s312
      %s316 = sphi 0, %s315
      %s332 = sphi 0, %s316
      %s338 = sphi 0, %s340
      %s341 = sphi 0, %s338
      %s342 = sphi 0, %s341
      %s358 = sphi 0, %s342
      %s364 = sphi 0, %s366
      %s367 = sphi 0, %s364
      %s368 = sphi 0, %s367
      %s384 = sphi 0, %s368
    $region4: #{tpu_custom_call.1} parent=1 // loop_header_branch
      %33 = sbr.rel (%p31) target = $region8
    $region5: #{tpu_custom_call.1} parent=1 // loop_body
      %s35 = ssub.s32 %s30, 1
      %s36 = ssub.s32 %s30, 2
      %s43 = sadd.s32 1, %s38
      %p44 = scmp.ge.s32.totalorder %s43, 2
      %s45 = scalar_select %p44, 0, %s43
      %s46 = sadd.s32 1, %s37
      %s47 = scalar_select %p44, %s46, %s37
      %p48 = scmp.ge.s32.totalorder %s47, 2
      %s49 = scalar_select %p48, 0, %s47
      %s50 = ssub.s32 %s37, %s49
      %p51 = scmp.eq.s32.totalorder %s50, 0
      %s53 = sadd.s32 %s52, 1
      %s54 = scalar_select %p51, %s52, %s53
      %p57 = pneg %p51
      %p58 = scmp.eq.s32.totalorder %s30, 3
      %p59 = por %p57, %p58
      %p60 = scmp.ne.s32.totalorder %s52, %s55
      %p61 = scmp.eq.s32.totalorder %s30, 0
      %p62 = por %p60, %p61
      %p63 = scmp.ne.s32.totalorder %s52, %s55
      %p64 = scmp.eq.s32.totalorder %s35, 3
      %p65 = por %p63, %p64
      %p66 = scmp.ne.s32.totalorder %s55, %s56
      %p67 = scmp.eq.s32.totalorder %s35, 0
      %p68 = por %p66, %p67
      %p69 = scmp.ne.s32.totalorder %s55, %s56
      %p70 = scmp.eq.s32.totalorder %s36, 3
      %p71 = por %p69, %p70
      %p73 = scmp.ne.s32.totalorder %s56, %s72
      %p74 = scmp.eq.s32.totalorder %s36, 0
      %p75 = por %p73, %p74
      %s76 = ssub.s32 %s38, %s45
      %p77 = scmp.eq.s32.totalorder %s76, 0
      %s79 = sadd.s32 %s78, 1
      %s80 = scalar_select %p77, %s78, %s79
      %p83 = pneg %p77
      %p84 = scmp.eq.s32.totalorder %s30, 3
      %p85 = por %p83, %p84
      %p86 = scmp.ne.s32.totalorder %s78, %s81
      %p87 = scmp.eq.s32.totalorder %s30, 0
      %p88 = por %p86, %p87
      %p89 = scmp.ne.s32.totalorder %s78, %s81
      %p90 = scmp.eq.s32.totalorder %s35, 3
      %p91 = por %p89, %p90
      %p92 = scmp.ne.s32.totalorder %s81, %s82
      %p93 = scmp.eq.s32.totalorder %s35, 0
      %p94 = por %p92, %p93
      %p95 = scmp.ne.s32.totalorder %s81, %s82
      %p96 = scmp.eq.s32.totalorder %s36, 3
      %p97 = por %p95, %p96
      %p99 = scmp.ne.s32.totalorder %s82, %s98
      %p100 = scmp.eq.s32.totalorder %s36, 0
      %p101 = por %p99, %p100
      %s102 = ssub.s32 %s38, %s45
      %p103 = scmp.eq.s32.totalorder %s102, 0
      %s105 = sadd.s32 %s104, 1
      %s106 = scalar_select %p103, %s104, %s105
      %p109 = pneg %p103
      %p110 = scmp.eq.s32.totalorder %s30, 3
      %p111 = por %p109, %p110
      %p112 = scmp.ne.s32.totalorder %s104, %s107
      %p113 = scmp.eq.s32.totalorder %s30, 0
      %p114 = por %p112, %p113
      %p115 = scmp.ne.s32.totalorder %s104, %s107
      %p116 = scmp.eq.s32.totalorder %s35, 3
      %p117 = por %p115, %p116
      %p118 = scmp.ne.s32.totalorder %s107, %s108
      %p119 = scmp.eq.s32.totalorder %s35, 0
      %p120 = por %p118, %p119
      %p121 = scmp.ne.s32.totalorder %s107, %s108
      %p122 = scmp.eq.s32.totalorder %s36, 3
      %p123 = por %p121, %p122
      %p125 = scmp.ne.s32.totalorder %s108, %s124
      %p126 = scmp.eq.s32.totalorder %s36, 0
      %p127 = por %p125, %p126
      %s128 = ssub.s32 %s38, %s45
      %p129 = scmp.eq.s32.totalorder %s128, 0
      %s131 = sadd.s32 %s130, 1
      %s132 = scalar_select %p129, %s130, %s131
      %p135 = pneg %p129
      %p136 = scmp.eq.s32.totalorder %s30, 3
      %p137 = por %p135, %p136
      %p138 = scmp.ne.s32.totalorder %s130, %s133
      %p139 = scmp.eq.s32.totalorder %s30, 0
      %p140 = por %p138, %p139
      %p141 = scmp.ne.s32.totalorder %s130, %s133
      %p142 = scmp.eq.s32.totalorder %s35, 3
      %p143 = por %p141, %p142
      %p144 = scmp.ne.s32.totalorder %s133, %s134
      %p145 = scmp.eq.s32.totalorder %s35, 0
      %p146 = por %p144, %p145
      %p147 = scmp.ne.s32.totalorder %s133, %s134
      %p148 = scmp.eq.s32.totalorder %s36, 3
      %p149 = por %p147, %p148
      %p151 = scmp.ne.s32.totalorder %s134, %s150
      %p152 = scmp.eq.s32.totalorder %s36, 0
      %p153 = por %p151, %p152
      %s154 = ssub.s32 %s38, %s45
      %p155 = scmp.eq.s32.totalorder %s154, 0
      %s157 = sadd.s32 %s156, 1
      %s158 = scalar_select %p155, %s156, %s157
      %p161 = pneg %p155
      %p162 = scmp.eq.s32.totalorder %s30, 3
      %p163 = por %p161, %p162
      %p164 = scmp.ne.s32.totalorder %s156, %s159
      %p165 = scmp.eq.s32.totalorder %s30, 0
      %p166 = por %p164, %p165
      %p167 = scmp.ne.s32.totalorder %s156, %s159
      %p168 = scmp.eq.s32.totalorder %s35, 3
      %p169 = por %p167, %p168
      %p170 = scmp.ne.s32.totalorder %s159, %s160
      %p171 = scmp.eq.s32.totalorder %s35, 0
      %p172 = por %p170, %p171
      %p173 = scmp.ne.s32.totalorder %s159, %s160
      %p174 = scmp.eq.s32.totalorder %s36, 3
      %p175 = por %p173, %p174
      %p177 = scmp.ne.s32.totalorder %s160, %s176
      %p178 = scmp.eq.s32.totalorder %s36, 0
      %p179 = por %p177, %p178
      %s180 = ssub.s32 %s38, %s45
      %p181 = scmp.eq.s32.totalorder %s180, 0
      %s183 = sadd.s32 %s182, 1
      %s184 = scalar_select %p181, %s182, %s183
      %p187 = pneg %p181
      %p188 = scmp.eq.s32.totalorder %s30, 3
      %p189 = por %p187, %p188
      %p190 = scmp.ne.s32.totalorder %s182, %s185
      %p191 = scmp.eq.s32.totalorder %s30, 0
      %p192 = por %p190, %p191
      %p193 = scmp.ne.s32.totalorder %s182, %s185
      %p194 = scmp.eq.s32.totalorder %s35, 3
      %p195 = por %p193, %p194
      %p196 = scmp.ne.s32.totalorder %s185, %s186
      %p197 = scmp.eq.s32.totalorder %s35, 0
      %p198 = por %p196, %p197
      %p199 = scmp.ne.s32.totalorder %s185, %s186
      %p200 = scmp.eq.s32.totalorder %s36, 3
      %p201 = por %p199, %p200
      %p203 = scmp.ne.s32.totalorder %s186, %s202
      %p204 = scmp.eq.s32.totalorder %s36, 0
      %p205 = por %p203, %p204
      %s206 = ssub.s32 %s38, %s45
      %p207 = scmp.eq.s32.totalorder %s206, 0
      %s209 = sadd.s32 %s208, 1
      %s210 = scalar_select %p207, %s208, %s209
      %p213 = pneg %p207
      %p214 = scmp.eq.s32.totalorder %s30, 3
      %p215 = por %p213, %p214
      %p216 = scmp.ne.s32.totalorder %s208, %s211
      %p217 = scmp.eq.s32.totalorder %s30, 0
      %p218 = por %p216, %p217
      %p219 = scmp.ne.s32.totalorder %s208, %s211
      %p220 = scmp.eq.s32.totalorder %s35, 3
      %p221 = por %p219, %p220
      %p222 = scmp.ne.s32.totalorder %s211, %s212
      %p223 = scmp.eq.s32.totalorder %s35, 0
      %p224 = por %p222, %p223
      %p225 = scmp.ne.s32.totalorder %s211, %s212
      %p226 = scmp.eq.s32.totalorder %s36, 3
      %p227 = por %p225, %p226
      %p229 = scmp.ne.s32.totalorder %s212, %s228
      %p230 = scmp.eq.s32.totalorder %s36, 0
      %p231 = por %p229, %p230
      %s232 = ssub.s32 %s38, %s45
      %p233 = scmp.eq.s32.totalorder %s232, 0
      %s235 = sadd.s32 %s234, 1
      %s236 = scalar_select %p233, %s234, %s235
      %p239 = pneg %p233
      %p240 = scmp.eq.s32.totalorder %s30, 3
      %p241 = por %p239, %p240
      %p242 = scmp.ne.s32.totalorder %s234, %s237
      %p243 = scmp.eq.s32.totalorder %s30, 0
      %p244 = por %p242, %p243
      %p245 = scmp.ne.s32.totalorder %s234, %s237
      %p246 = scmp.eq.s32.totalorder %s35, 3
      %p247 = por %p245, %p246
      %p248 = scmp.ne.s32.totalorder %s237, %s238
      %p249 = scmp.eq.s32.totalorder %s35, 0
      %p250 = por %p248, %p249
      %p251 = scmp.ne.s32.totalorder %s237, %s238
      %p252 = scmp.eq.s32.totalorder %s36, 3
      %p253 = por %p251, %p252
      %p255 = scmp.ne.s32.totalorder %s238, %s254
      %p256 = scmp.eq.s32.totalorder %s36, 0
      %p257 = por %p255, %p256
      %s258 = ssub.s32 %s38, %s45
      %p259 = scmp.eq.s32.totalorder %s258, 0
      %s261 = sadd.s32 %s260, 1
      %s262 = scalar_select %p259, %s260, %s261
      %p265 = pneg %p259
      %p266 = scmp.eq.s32.totalorder %s30, 3
      %p267 = por %p265, %p266
      %p268 = scmp.ne.s32.totalorder %s260, %s263
      %p269 = scmp.eq.s32.totalorder %s30, 0
      %p270 = por %p268, %p269
      %p271 = scmp.ne.s32.totalorder %s260, %s263
      %p272 = scmp.eq.s32.totalorder %s35, 3
      %p273 = por %p271, %p272
      %p274 = scmp.ne.s32.totalorder %s263, %s264
      %p275 = scmp.eq.s32.totalorder %s35, 0
      %p276 = por %p274, %p275
      %p277 = scmp.ne.s32.totalorder %s263, %s264
      %p278 = scmp.eq.s32.totalorder %s36, 3
      %p279 = por %p277, %p278
      %p281 = scmp.ne.s32.totalorder %s264, %s280
      %p282 = scmp.eq.s32.totalorder %s36, 0
      %p283 = por %p281, %p282
      %s284 = ssub.s32 %s38, %s45
      %p285 = scmp.eq.s32.totalorder %s284, 0
      %s287 = sadd.s32 %s286, 1
      %s288 = scalar_select %p285, %s286, %s287
      %p291 = pneg %p285
      %p292 = scmp.eq.s32.totalorder %s30, 3
      %p293 = por %p291, %p292
      %p294 = scmp.ne.s32.totalorder %s286, %s289
      %p295 = scmp.eq.s32.totalorder %s30, 0
      %p296 = por %p294, %p295
      %p297 = scmp.ne.s32.totalorder %s286, %s289
      %p298 = scmp.eq.s32.totalorder %s35, 3
      %p299 = por %p297, %p298
      %p300 = scmp.ne.s32.totalorder %s289, %s290
      %p301 = scmp.eq.s32.totalorder %s35, 0
      %p302 = por %p300, %p301
      %p303 = scmp.ne.s32.totalorder %s289, %s290
      %p304 = scmp.eq.s32.totalorder %s36, 3
      %p305 = por %p303, %p304
      %p307 = scmp.ne.s32.totalorder %s290, %s306
      %p308 = scmp.eq.s32.totalorder %s36, 0
      %p309 = por %p307, %p308
      %s310 = ssub.s32 %s38, %s45
      %p311 = scmp.eq.s32.totalorder %s310, 0
      %s313 = sadd.s32 %s312, 1
      %s314 = scalar_select %p311, %s312, %s313
      %p317 = pneg %p311
      %p318 = scmp.eq.s32.totalorder %s30, 3
      %p319 = por %p317, %p318
      %p320 = scmp.ne.s32.totalorder %s312, %s315
      %p321 = scmp.eq.s32.totalorder %s30, 0
      %p322 = por %p320, %p321
      %p323 = scmp.ne.s32.totalorder %s312, %s315
      %p324 = scmp.eq.s32.totalorder %s35, 3
      %p325 = por %p323, %p324
      %p326 = scmp.ne.s32.totalorder %s315, %s316
      %p327 = scmp.eq.s32.totalorder %s35, 0
      %p328 = por %p326, %p327
      %p329 = scmp.ne.s32.totalorder %s315, %s316
      %p330 = scmp.eq.s32.totalorder %s36, 3
      %p331 = por %p329, %p330
      %p333 = scmp.ne.s32.totalorder %s316, %s332
      %p334 = scmp.eq.s32.totalorder %s36, 0
      %p335 = por %p333, %p334
      %s336 = ssub.s32 %s38, %s45
      %p337 = scmp.eq.s32.totalorder %s336, 0
      %s339 = sadd.s32 %s338, 1
      %s340 = scalar_select %p337, %s338, %s339
      %p343 = pneg %p337
      %p344 = scmp.eq.s32.totalorder %s30, 3
      %p345 = por %p343, %p344
      %p346 = scmp.ne.s32.totalorder %s338, %s341
      %p347 = scmp.eq.s32.totalorder %s30, 0
      %p348 = por %p346, %p347
      %p349 = scmp.ne.s32.totalorder %s338, %s341
      %p350 = scmp.eq.s32.totalorder %s35, 3
      %p351 = por %p349, %p350
      %p352 = scmp.ne.s32.totalorder %s341, %s342
      %p353 = scmp.eq.s32.totalorder %s35, 0
      %p354 = por %p352, %p353
      %p355 = scmp.ne.s32.totalorder %s341, %s342
      %p356 = scmp.eq.s32.totalorder %s36, 3
      %p357 = por %p355, %p356
      %p359 = scmp.ne.s32.totalorder %s342, %s358
      %p360 = scmp.eq.s32.totalorder %s36, 0
      %p361 = por %p359, %p360
      %s362 = ssub.s32 %s37, %s49
      %p363 = scmp.eq.s32.totalorder %s362, 0
      %s365 = sadd.s32 %s364, 1
      %s366 = scalar_select %p363, %s364, %s365
      %p369 = pneg %p363
      %p370 = scmp.eq.s32.totalorder %s30, 3
      %p371 = por %p369, %p370
      %p372 = scmp.ne.s32.totalorder %s364, %s367
      %p373 = scmp.eq.s32.totalorder %s30, 0
      %p374 = por %p372, %p373
      %p375 = scmp.ne.s32.totalorder %s364, %s367
      %p376 = scmp.eq.s32.totalorder %s35, 3
      %p377 = por %p375, %p376
      %p378 = scmp.ne.s32.totalorder %s367, %s368
      %p379 = scmp.eq.s32.totalorder %s35, 0
      %p380 = por %p378, %p379
      %p381 = scmp.ne.s32.totalorder %s367, %s368
      %p382 = scmp.eq.s32.totalorder %s36, 3
      %p383 = por %p381, %p382
      %p385 = scmp.ne.s32.totalorder %s368, %s384
      %p386 = scmp.eq.s32.totalorder %s36, 0
      %p387 = por %p385, %p386
      %p388 = scmp.le.s32.totalorder 1, %s30
      %p389 = scmp.lt.s32.totalorder %s30, 5
      %p390 = pnand %p388, %p389
      %p391 = pneg %p390
      // Predicated region
      $region9: #{tpu_custom_call.1} parent=5 // pred_check
        _
      $region10: #{tpu_custom_call.1} parent=5 // pred_check_branch
        %393 = sbr.rel (%p390) target = $region12
      $region11: #{tpu_custom_call.1} parent=5 // pred_region
        %s394 = ssub.s32 %s30, 1
      $region12: #{tpu_custom_call.1} parent=5 // pred_fallthru
        _
      %p395 = scmp.lt.s32.totalorder %s30, 4
      // Predicated region
      $region13: #{tpu_custom_call.1} parent=5 // pred_check
        %p396 = pneg %p395
      $region14: #{tpu_custom_call.1} parent=5 // pred_check_branch
        %398 = sbr.rel (%p396) target = $region16
      $region15: #{tpu_custom_call.1} parent=5 // pred_region
        // Predicated region
        $region17: #{tpu_custom_call.1} parent=15 // pred_check
          %p399 = pneg %p62
        $region18: #{tpu_custom_call.1} parent=15 // pred_check_branch
          %401 = sbr.rel (%p399) target = $region20
        $region19: #{tpu_custom_call.1} parent=15 // pred_region
          %s402 = sand.u32 %s52, 1
          %s403 = scalar_lea.sflag [#allocation5], %s402
          %s404 = sand.u32 %s52, 1
          %s405 = smul.addr %s404, 8
          %s406 = scalar_lea.vmem [#allocation4], %s405
          %s408 = ssub.s32 128, 128
          %409 = vsyncadd %s403, %s408
          %s410 = smul.addr %s37, 128
          %s411 = scalar_lea.hbm %s0, %s410
          %s413 = sshll.u32 %s406, 4
          %s414 = int_to_ptr.vmem [resolvable:$true] %s413
          %416 = dma.hbm_to_vmem [thread:$0]  %s411, 128, %s414, %s403
        $region20: #{tpu_custom_call.1} parent=15 // pred_fallthru
          _
        // Predicated region
        $region21: #{tpu_custom_call.1} parent=15 // pred_check
          %p417 = pneg %p88
        $region22: #{tpu_custom_call.1} parent=15 // pred_check_branch
          %419 = sbr.rel (%p417) target = $region24
        $region23: #{tpu_custom_call.1} parent=15 // pred_region
          %p420 = scmp.lt.s32.totalorder %s38, 1
          %s421 = scalar_select %p420, %s38, 1
          %s422 = scalar_lea.vmem %s1, %s421
        $region24: #{tpu_custom_call.1} parent=15 // pred_fallthru
          _
        // Predicated region
        $region25: #{tpu_custom_call.1} parent=15 // pred_check
          %p423 = pneg %p114
        $region26: #{tpu_custom_call.1} parent=15 // pred_check_branch
          %425 = sbr.rel (%p423) target = $region28
        $region27: #{tpu_custom_call.1} parent=15 // pred_region
          %p426 = scmp.lt.s32.totalorder %s38, 1
          %s427 = scalar_select %p426, %s38, 1
          %s428 = scalar_lea.vmem %s2, %s427
        $region28: #{tpu_custom_call.1} parent=15 // pred_fallthru
          _
        // Predicated region
        $region29: #{tpu_custom_call.1} parent=15 // pred_check
          %p429 = pneg %p140
        $region30: #{tpu_custom_call.1} parent=15 // pred_check_branch
          %431 = sbr.rel (%p429) target = $region32
        $region31: #{tpu_custom_call.1} parent=15 // pred_region
          %p432 = scmp.lt.s32.totalorder %s38, 1
          %s433 = scalar_select %p432, %s38, 1
          %s434 = smul.addr %s433, 4
          %s435 = smul.addr %s434, 4
          %s436 = scalar_lea.vmem %s3, %s435
        $region32: #{tpu_custom_call.1} parent=15 // pred_fallthru
          _
        // Predicated region
        $region33: #{tpu_custom_call.1} parent=15 // pred_check
          %p437 = pneg %p166
        $region34: #{tpu_custom_call.1} parent=15 // pred_check_branch
          %439 = sbr.rel (%p437) target = $region36
        $region35: #{tpu_custom_call.1} parent=15 // pred_region
          %p440 = scmp.lt.s32.totalorder %s38, 1
          %s441 = scalar_select %p440, %s38, 1
          %s442 = smul.addr %s441, 4
          %s443 = smul.addr %s442, 4
          %s444 = scalar_lea.vmem %s4, %s443
        $region36: #{tpu_custom_call.1} parent=15 // pred_fallthru
          _
        // Predicated region
        $region37: #{tpu_custom_call.1} parent=15 // pred_check
          %p445 = pneg %p192
        $region38: #{tpu_custom_call.1} parent=15 // pred_check_branch
          %447 = sbr.rel (%p445) target = $region40
        $region39: #{tpu_custom_call.1} parent=15 // pred_region
          %s448 = sand.u32 %s30, 1
          %s449 = scalar_lea.sflag [#allocation8], %s448
          %s450 = sand.u32 %s182, 1
          %s451 = scalar_lea.vmem [#allocation7], %s450
          %s453 = ssub.s32 16, 16
          %454 = vsyncadd %s449, %s453
          %s455 = smul.addr %s38, 16
          %s456 = scalar_lea.hbm %s5, %s455
          %s458 = sshll.u32 %s451, 4
          %s459 = int_to_ptr.vmem [resolvable:$true] %s458
          %461 = dma.hbm_to_vmem [thread:$0]  %s456, 16, %s459, %s449
        $region40: #{tpu_custom_call.1} parent=15 // pred_fallthru
          _
        // Predicated region
        $region41: #{tpu_custom_call.1} parent=15 // pred_check
          %p462 = pneg %p218
        $region42: #{tpu_custom_call.1} parent=15 // pred_check_branch
          %464 = sbr.rel (%p462) target = $region44
        $region43: #{tpu_custom_call.1} parent=15 // pred_region
          %s465 = sand.u32 %s30, 1
          %s466 = scalar_lea.sflag [#allocation8], %s465
          %s467 = sand.u32 %s208, 1
          %s468 = scalar_lea.vmem [#allocation9], %s467
          %s470 = ssub.s32 16, 16
          %471 = vsyncadd %s466, %s470
          %s472 = smul.addr %s38, 16
          %s473 = scalar_lea.hbm %s6, %s472
          %s475 = sshll.u32 %s468, 4
          %s476 = int_to_ptr.vmem [resolvable:$true] %s475
          %478 = dma.hbm_to_vmem [thread:$0]  %s473, 16, %s476, %s466
        $region44: #{tpu_custom_call.1} parent=15 // pred_fallthru
          _
        // Predicated region
        $region45: #{tpu_custom_call.1} parent=15 // pred_check
          %p479 = pneg %p244
        $region46: #{tpu_custom_call.1} parent=15 // pred_check_branch
          %481 = sbr.rel (%p479) target = $region48
        $region47: #{tpu_custom_call.1} parent=15 // pred_region
          %s482 = sand.u32 %s30, 1
          %s483 = scalar_lea.sflag [#allocation11], %s482
          %s484 = sand.u32 %s234, 1
          %s485 = scalar_lea.vmem [#allocation10], %s484
          %s487 = ssub.s32 16, 16
          %488 = vsyncadd %s483, %s487
          %s489 = smul.addr %s38, 16
          %s490 = scalar_lea.hbm %s7, %s489
          %s492 = sshll.u32 %s485, 4
          %s493 = int_to_ptr.vmem [resolvable:$true] %s492
          %495 = dma.hbm_to_vmem [thread:$0]  %s490, 16, %s493, %s483
        $region48: #{tpu_custom_call.1} parent=15 // pred_fallthru
          _
        // Predicated region
        $region49: #{tpu_custom_call.1} parent=15 // pred_check
          %p496 = pneg %p270
        $region50: #{tpu_custom_call.1} parent=15 // pred_check_branch
          %498 = sbr.rel (%p496) target = $region52
        $region51: #{tpu_custom_call.1} parent=15 // pred_region
          %p499 = scmp.lt.s32.totalorder %s38, 1
          %s500 = scalar_select %p499, %s38, 1
          %s501 = smul.addr %s500, 4
          %s502 = smul.addr %s501, 4
          %s503 = scalar_lea.vmem %s8, %s502
        $region52: #{tpu_custom_call.1} parent=15 // pred_fallthru
          _
        // Predicated region
        $region53: #{tpu_custom_call.1} parent=15 // pred_check
          %p504 = pneg %p296
        $region54: #{tpu_custom_call.1} parent=15 // pred_check_branch
          %506 = sbr.rel (%p504) target = $region56
        $region55: #{tpu_custom_call.1} parent=15 // pred_region
          %s507 = sand.u32 %s30, 1
          %s508 = scalar_lea.sflag [#allocation11], %s507
          %s509 = sand.u32 %s286, 1
          %s510 = scalar_lea.vmem [#allocation12], %s509
          %s512 = ssub.s32 16, 16
          %513 = vsyncadd %s508, %s512
          %s514 = smul.addr %s38, 16
          %s515 = scalar_lea.hbm %s9, %s514
          %s517 = sshll.u32 %s510, 4
          %s518 = int_to_ptr.vmem [resolvable:$true] %s517
          %520 = dma.hbm_to_vmem [thread:$0]  %s515, 16, %s518, %s508
        $region56: #{tpu_custom_call.1} parent=15 // pred_fallthru
          _
        // Predicated region
        $region57: #{tpu_custom_call.1} parent=15 // pred_check
          %p521 = pneg %p322
        $region58: #{tpu_custom_call.1} parent=15 // pred_check_branch
          %523 = sbr.rel (%p521) target = $region60
        $region59: #{tpu_custom_call.1} parent=15 // pred_region
          %p524 = scmp.lt.s32.totalorder %s38, 1
          %s525 = scalar_select %p524, %s38, 1
          %s526 = smul.addr %s525, 8
          %s527 = smul.addr %s526, 4
          %s528 = scalar_lea.vmem %s10, %s527
        $region60: #{tpu_custom_call.1} parent=15 // pred_fallthru
          _
        // Predicated region
        $region61: #{tpu_custom_call.1} parent=15 // pred_check
          %p529 = pneg %p348
        $region62: #{tpu_custom_call.1} parent=15 // pred_check_branch
          %531 = sbr.rel (%p529) target = $region64
        $region63: #{tpu_custom_call.1} parent=15 // pred_region
          %p532 = scmp.lt.s32.totalorder %s38, 1
          %s533 = scalar_select %p532, %s38, 1
          %s534 = scalar_lea.vmem %s11, %s533
        $region64: #{tpu_custom_call.1} parent=15 // pred_fallthru
          _
      $region16: #{tpu_custom_call.1} parent=5 // pred_fallthru
        _
      %p535 = scmp.le.s32.totalorder 1, %s30
      %p536 = scmp.lt.s32.totalorder %s30, 5
      %p537 = pnand %p535, %p536
      %p538 = pneg %p537
      // Predicated region
      $region65: #{tpu_custom_call.1} parent=5 // pred_check
        _
      $region66: #{tpu_custom_call.1} parent=5 // pred_check_branch
        %540 = sbr.rel (%p537) target = $region68
      $region67: #{tpu_custom_call.1} parent=5 // pred_region
        %s541 = ssub.s32 %s30, 1
        %s542 = sand.u32 %s55, 1
        %s543 = scalar_lea.sflag [#allocation5], %s542
        %s544 = sand.u32 %s55, 1
        %s545 = smul.addr %s544, 8
        %s546 = scalar_lea.vmem [#allocation4], %s545
        // Predicated region
        $region69: #{tpu_custom_call.1} parent=67 // pred_check
          %p547 = pneg %p68
        $region70: #{tpu_custom_call.1} parent=67 // pred_check_branch
          %549 = sbr.rel (%p547) target = $region72
        $region71: #{tpu_custom_call.1} parent=67 // pred_region
          %550 = dma.done %s543, 128
        $region72: #{tpu_custom_call.1} parent=67 // pred_fallthru
          _
        %s551 = sand.u32 %s35, 1
        %s552 = scalar_lea.sflag [#allocation8], %s551
        %s553 = sand.u32 %s185, 1
        %s554 = scalar_lea.vmem [#allocation7], %s553
        // Predicated region
        $region73: #{tpu_custom_call.1} parent=67 // pred_check
          %p555 = pneg %p198
        $region74: #{tpu_custom_call.1} parent=67 // pred_check_branch
          %557 = sbr.rel (%p555) target = $region76
        $region75: #{tpu_custom_call.1} parent=67 // pred_region
          %558 = dma.done %s552, 16
        $region76: #{tpu_custom_call.1} parent=67 // pred_fallthru
          _
        %s559 = sand.u32 %s35, 1
        %s560 = scalar_lea.sflag [#allocation8], %s559
        %s561 = sand.u32 %s211, 1
        %s562 = scalar_lea.vmem [#allocation9], %s561
        // Predicated region
        $region77: #{tpu_custom_call.1} parent=67 // pred_check
          %p563 = pneg %p224
        $region78: #{tpu_custom_call.1} parent=67 // pred_check_branch
          %565 = sbr.rel (%p563) target = $region80
        $region79: #{tpu_custom_call.1} parent=67 // pred_region
          %566 = dma.done %s560, 16
        $region80: #{tpu_custom_call.1} parent=67 // pred_fallthru
          _
        %s567 = sand.u32 %s35, 1
        %s568 = scalar_lea.sflag [#allocation11], %s567
        %s569 = sand.u32 %s237, 1
        %s570 = scalar_lea.vmem [#allocation10], %s569
        // Predicated region
        $region81: #{tpu_custom_call.1} parent=67 // pred_check
          %p571 = pneg %p250
        $region82: #{tpu_custom_call.1} parent=67 // pred_check_branch
          %573 = sbr.rel (%p571) target = $region84
        $region83: #{tpu_custom_call.1} parent=67 // pred_region
          %574 = dma.done %s568, 16
        $region84: #{tpu_custom_call.1} parent=67 // pred_fallthru
          _
        %s575 = sand.u32 %s35, 1
        %s576 = scalar_lea.sflag [#allocation11], %s575
        %s577 = sand.u32 %s289, 1
        %s578 = scalar_lea.vmem [#allocation12], %s577
        // Predicated region
        $region85: #{tpu_custom_call.1} parent=67 // pred_check
          %p579 = pneg %p302
        $region86: #{tpu_custom_call.1} parent=67 // pred_check_branch
          %581 = sbr.rel (%p579) target = $region88
        $region87: #{tpu_custom_call.1} parent=67 // pred_region
          %582 = dma.done %s576, 16
        $region88: #{tpu_custom_call.1} parent=67 // pred_fallthru
          _
        %s583 = sand.u32 %s55, 1
        %s584 = scalar_lea.sflag [#allocation5], %s583
        %s585 = sand.u32 %s55, 1
        %s586 = smul.addr %s585, 8
        %s587 = scalar_lea.vmem [#allocation4], %s586
        %p588 = pneg %p68
        %p589 = pneg %p65
        %p590 = scmp.lt.s32.totalorder %s40, 1
        %s591 = scalar_select %p590, %s40, 1
        %s592 = scalar_lea.vmem %s1, %s591
        %p593 = pneg %p94
        %p594 = pneg %p91
        %p595 = scmp.lt.s32.totalorder %s40, 1
        %s596 = scalar_select %p595, %s40, 1
        %s597 = scalar_lea.vmem %s2, %s596
        %p598 = pneg %p120
        %p599 = pneg %p117
        %p600 = scmp.lt.s32.totalorder %s40, 1
        %s601 = scalar_select %p600, %s40, 1
        %s602 = smul.addr %s601, 4
        %s603 = smul.addr %s602, 4
        %s604 = scalar_lea.vmem %s3, %s603
        %p605 = pneg %p146
        %p606 = pneg %p143
        %p607 = scmp.lt.s32.totalorder %s40, 1
        %s608 = scalar_select %p607, %s40, 1
        %s609 = smul.addr %s608, 4
        %s610 = smul.addr %s609, 4
        %s611 = scalar_lea.vmem %s4, %s610
        %p612 = pneg %p172
        %p613 = pneg %p169
        %s614 = sand.u32 %s35, 1
        %s615 = scalar_lea.sflag [#allocation8], %s614
        %s616 = sand.u32 %s185, 1
        %s617 = scalar_lea.vmem [#allocation7], %s616
        %p618 = pneg %p198
        %p619 = pneg %p195
        %s620 = sand.u32 %s35, 1
        %s621 = scalar_lea.sflag [#allocation8], %s620
        %s622 = sand.u32 %s211, 1
        %s623 = scalar_lea.vmem [#allocation9], %s622
        %p624 = pneg %p224
        %p625 = pneg %p221
        %s626 = sand.u32 %s35, 1
        %s627 = scalar_lea.sflag [#allocation11], %s626
        %s628 = sand.u32 %s237, 1
        %s629 = scalar_lea.vmem [#allocation10], %s628
        %p630 = pneg %p250
        %p631 = pneg %p247
        %p632 = scmp.lt.s32.totalorder %s40, 1
        %s633 = scalar_select %p632, %s40, 1
        %s634 = smul.addr %s633, 4
        %s635 = smul.addr %s634, 4
        %s636 = scalar_lea.vmem %s8, %s635
        %p637 = pneg %p276
        %p638 = pneg %p273
        %s639 = sand.u32 %s35, 1
        %s640 = scalar_lea.sflag [#allocation11], %s639
        %s641 = sand.u32 %s289, 1
        %s642 = scalar_lea.vmem [#allocation12], %s641
        %p643 = pneg %p302
        %p644 = pneg %p299
        %p645 = scmp.lt.s32.totalorder %s40, 1
        %s646 = scalar_select %p645, %s40, 1
        %s647 = smul.addr %s646, 8
        %s648 = smul.addr %s647, 4
        %s649 = scalar_lea.vmem %s10, %s648
        %p650 = pneg %p328
        %p651 = pneg %p325
        %p652 = scmp.lt.s32.totalorder %s40, 1
        %s653 = scalar_select %p652, %s40, 1
        %s654 = scalar_lea.vmem %s11, %s653
        %p655 = pneg %p354
        %p656 = pneg %p351
        %p657 = pneg %p380
        %p658 = pneg %p377
        %s659 = sand.u32 %s367, 1
        %s660 = scalar_lea.sflag [#allocation6], %s659
        %s661 = sand.u32 %s367, 1
        %s662 = smul.addr %s661, 8
        %s663 = scalar_lea.vmem [#allocation13], %s662
        %p664 = scmp.lt.s32.totalorder %s40, 1
        %s665 = scalar_select %p664, %s40, 1
        %s666 = scalar_lea.vmem %s1, %s665
        %p667 = scmp.lt.s32.totalorder %s40, 1
        %s668 = scalar_select %p667, %s40, 1
        %s669 = scalar_lea.vmem %s2, %s668
        %p670 = scmp.lt.s32.totalorder %s40, 1
        %s671 = scalar_select %p670, %s40, 1
        %s672 = smul.addr %s671, 4
        %s673 = smul.addr %s672, 4
        %s674 = scalar_lea.vmem %s3, %s673
        %p675 = scmp.lt.s32.totalorder %s40, 1
        %s676 = scalar_select %p675, %s40, 1
        %s677 = smul.addr %s676, 4
        %s678 = smul.addr %s677, 4
        %s679 = scalar_lea.vmem %s4, %s678
        %p680 = scmp.lt.s32.totalorder %s40, 1
        %s681 = scalar_select %p680, %s40, 1
        %s682 = smul.addr %s681, 4
        %s683 = smul.addr %s682, 4
        %s684 = scalar_lea.vmem %s8, %s683
        %p685 = scmp.lt.s32.totalorder %s40, 1
        %s686 = scalar_select %p685, %s40, 1
        %s687 = smul.addr %s686, 8
        %s688 = smul.addr %s687, 4
        %s689 = scalar_lea.vmem %s10, %s688
        %p690 = scmp.lt.s32.totalorder %s40, 1
        %s691 = scalar_select %p690, %s40, 1
        %s692 = scalar_lea.vmem %s11, %s691
        %p694 = scmp.eq.s32.totalorder %s40, 0
        // Predicated region
        $region89: #{tpu_custom_call.1} parent=67 // pred_check
          %p695 = pneg %p694
        $region90: #{tpu_custom_call.1} parent=67 // pred_check_branch
          %697 = sbr.rel (%p695) target = $region92
        $region91: #{tpu_custom_call.1} parent=67 // pred_region
          %v698 = vld [vmem:[%s546] sm:$0xff]
          %vm699 = vcmask 261120
          %700 = vst.msk [vmem:[#allocation2] sm:$0xff] %vm699, %v698
        $region92: #{tpu_custom_call.1} parent=67 // pred_fallthru
          _
        %v701 = vld [vmem:[#allocation2] sm:$0xff]
        %vm702 = vcmask 261120
        %v703 = vsel %vm702, %v701, 0.0
        %704 = vadd.xlane.f32.xlu0 %v703
        %v705 = vpop.xlane.xlu0 %704
        %v706 = vrcp.pop 32.0
        %v707 = vmul.f32 %v705, %v706
        %v708 = vsub.f32 %v701, %v707
        %v709 = vmul.f32 %v708, %v708
        %v710 = vsel %vm702, %v709, 0.0
        %711 = vadd.xlane.f32.xlu0 %v710
        %v712 = vpop.xlane.xlu0 %711
        %v713 = vmul.f32 %v712, %v706
        %v714 = vadd.f32 %v713, 1e-05
        %v715 = vrsqrt.pop %v714
        %v716 = vmul.f32 %v708, %v715
        %v717 = vld [vmem:[%s666] sm:$0x1]
        %v719 = vlaneseq
        %v720 = vshrl.u32 %v719, 7
        %v721 = vsub.s32 0, %v720
        %v722 = vrot.slane %v717, %v721
        %v724 = vmul.f32 %v716, %v722
        %v725 = vld [vmem:[%s669] sm:$0x1]
        %v727 = vlaneseq
        %v728 = vshrl.u32 %v727, 7
        %v729 = vsub.s32 0, %v728
        %v730 = vrot.slane %v725, %v729
        %v732 = vadd.f32 %v724, %v730
        %v733 = vpack.c.bf16 %v732, %v732
        %v734 = vld [vmem:[%s674] sm:$0xf]
        %v735 = vld [vmem:[%s674 + $0x4] sm:$0xf]
        %v736 = vld [vmem:[%s674 + $0x8] sm:$0xf]
        %v737 = vld [vmem:[%s674 + $0xc] sm:$0xf]
        %v742 = vunpack.c.l.b16 %v734
        %v743 = vunpack.c.l.b16 %v735
        %v744 = vunpack.c.l.b16 %v736
        %v745 = vunpack.c.l.b16 %v737
        %v746 = vpack.c.b16 %v743, %v742
        %v747 = vpack.c.b16 %v745, %v744
        %v751 = vsel %vm702, %v733, 0
        %753 = vmatprep.subr.bf16.mxu0 0
        %754 = vmatpush1.bf16.msra.mxu0 %v746
        %755 = vmatprep.subr.bf16.mxu0 0
        %756 = vmatpush1.bf16.msra.mxu0 %v747
        %757 = vmatprep.subr.bf16.mxu0 0
        %758 = vmatpush1.bf16.msra.mxu0 0
        %759 = vmatprep.subr.bf16.mxu0 0
        %760 = vmatpush1.bf16.msra.mxu0 0
        %761 = vmatprep.subr.bf16.mxu0 0
        %762 = vmatpush1.bf16.msra.mxu0 0
        %763 = vmatprep.subr.bf16.mxu0 0
        %764 = vmatpush1.bf16.msra.mxu0 0
        %765 = vmatprep.subr.bf16.mxu0 0
        %766 = vmatpush1.bf16.msra.mxu0 0
        %767 = vmatprep.subr.bf16.mxu0 0
        %768 = vmatpush1.bf16.msra.mxu0 0
        %769 = vmatprep.subr.bf16.mxu0 0
        %770 = vmatpush1.bf16.msra.mxu0 0
        %771 = vmatprep.subr.bf16.mxu0 0
        %772 = vmatpush1.bf16.msra.mxu0 0
        %773 = vmatprep.subr.bf16.mxu0 0
        %774 = vmatpush1.bf16.msra.mxu0 0
        %775 = vmatprep.subr.bf16.mxu0 0
        %776 = vmatpush1.bf16.msra.mxu0 0
        %777 = vmatprep.subr.bf16.mxu0 0
        %778 = vmatpush1.bf16.msra.mxu0 0
        %779 = vmatprep.subr.bf16.mxu0 0
        %780 = vmatpush1.bf16.msra.mxu0 0
        %781 = vmatprep.subr.bf16.mxu0 0
        %782 = vmatpush1.bf16.msra.mxu0 0
        %783 = vmatprep.subr.bf16.mxu0 0
        %784 = vmatpush1.bf16.msra.mxu0 0
        %785 = vmatprep.mubr.bf16.mxu0 0
        %786 = vmatmul.mubr.bf16.gmra.mrb[0].mxu0 %v751
        %v787 = vpop.f32.mrb[0].mxu0
        %v788 = vadd.f32 0.0, %v787
        %v789 = vpop.f32.mrb[0].mxu0
        %v790 = vpop.f32.mrb[0].mxu0
        %v791 = vpop.f32.mrb[0].mxu0
        %792 = vdwg.mxu0
        %v793 = vmul.f32 %v788, 0.17677669
        %v794 = vpack.c.bf16 %v793, %v793
        %v795 = vpack.c.bf16 %v788, %v788
        %797 = vrot.lane.b32.xlu0 %v795, 96
        %v798 = vpop.permute.xlu0 %797
        %vm799 = vcmask 64512
        %v801 = vsel %vm799, %v794, 0
        %v804 = vsel %vm799, %v798, 0
        %806 = vmatprep.subr.bf16.mxu0 0
        %807 = vmatpush1.bf16.xpose.msra.mxu0 %v804
        %808 = vmatprep.subr.bf16.mxu0 0
        %809 = vmatpush1.bf16.xpose.msra.mxu0 0
        %810 = vmatprep.subr.bf16.mxu0 0
        %811 = vmatpush1.bf16.xpose.msra.mxu0 0
        %812 = vmatprep.subr.bf16.mxu0 0
        %813 = vmatpush1.bf16.xpose.msra.mxu0 0
        %814 = vmatprep.subr.bf16.mxu0 0
        %815 = vmatpush1.bf16.xpose.msra.mxu0 0
        %816 = vmatprep.subr.bf16.mxu0 0
        %817 = vmatpush1.bf16.xpose.msra.mxu0 0
        %818 = vmatprep.subr.bf16.mxu0 0
        %819 = vmatpush1.bf16.xpose.msra.mxu0 0
        %820 = vmatprep.subr.bf16.mxu0 0
        %821 = vmatpush1.bf16.xpose.msra.mxu0 0
        %822 = vmatprep.subr.bf16.mxu0 0
        %823 = vmatpush1.bf16.xpose.msra.mxu0 0
        %824 = vmatprep.subr.bf16.mxu0 0
        %825 = vmatpush1.bf16.xpose.msra.mxu0 0
        %826 = vmatprep.subr.bf16.mxu0 0
        %827 = vmatpush1.bf16.xpose.msra.mxu0 0
        %828 = vmatprep.subr.bf16.mxu0 0
        %829 = vmatpush1.bf16.xpose.msra.mxu0 0
        %830 = vmatprep.subr.bf16.mxu0 0
        %831 = vmatpush1.bf16.xpose.msra.mxu0 0
        %832 = vmatprep.subr.bf16.mxu0 0
        %833 = vmatpush1.bf16.xpose.msra.mxu0 0
        %834 = vmatprep.subr.bf16.mxu0 0
        %835 = vmatpush1.bf16.xpose.msra.mxu0 0
        %836 = vmatprep.subr.bf16.mxu0 0
        %837 = vmatpush1.bf16.xpose.msra.mxu0 0
        %838 = vmatprep.mubr.bf16.mxu0 0
        %839 = vmatmul.mubr.bf16.gmra.mrb[0].mxu0 %v801
        %v840 = vpop.f32.mrb[0].mxu0
        %v841 = vadd.f32 0.0, %v840
        %v842 = vpop.f32.mrb[0].mxu0
        %v843 = vpop.f32.mrb[0].mxu0
        %v844 = vpop.f32.mrb[0].mxu0
        %845 = vdwg.mxu0
        %v846 = vsel %vm799, %v841, -inf
        %847 = vmax.xlane.f32.xlu0 %v846
        %v848 = vpop.xlane.xlu0 %847
        %v849 = vsub.f32 %v841, %v848
        %v850 = vmul.f32 %v849, 1.442695
        %v851 = vpow.pop %v850
        %v852 = vsel %vm799, %v851, 0.0
        %853 = vadd.xlane.f32.xlu0 %v852
        %v854 = vpop.xlane.xlu0 %853
        %v855 = vrcp.pop %v854
        %v856 = vmul.f32 %v851, %v855
        %v857 = vpack.c.bf16 %v856, %v856
        %858 = vrot.lane.b32.xlu0 %v795, 64
        %v859 = vpop.permute.xlu0 %858
        %v861 = vsel %vm799, %v857, 0
        %vm863 = vcmask 1043456
        %v865 = vsel %vm863, %v859, 0
        %867 = vmatprep.subr.bf16.mxu0 0
        %868 = vmatpush1.bf16.msra.mxu0 %v865
        %869 = vmatprep.subr.bf16.mxu0 0
        %870 = vmatpush1.bf16.msra.mxu0 0
        %871 = vmatprep.subr.bf16.mxu0 0
        %872 = vmatpush1.bf16.msra.mxu0 0
        %873 = vmatprep.subr.bf16.mxu0 0
        %874 = vmatpush1.bf16.msra.mxu0 0
        %875 = vmatprep.subr.bf16.mxu0 0
        %876 = vmatpush1.bf16.msra.mxu0 0
        %877 = vmatprep.subr.bf16.mxu0 0
        %878 = vmatpush1.bf16.msra.mxu0 0
        %879 = vmatprep.subr.bf16.mxu0 0
        %880 = vmatpush1.bf16.msra.mxu0 0
        %881 = vmatprep.subr.bf16.mxu0 0
        %882 = vmatpush1.bf16.msra.mxu0 0
        %883 = vmatprep.subr.bf16.mxu0 0
        %884 = vmatpush1.bf16.msra.mxu0 0
        %885 = vmatprep.subr.bf16.mxu0 0
        %886 = vmatpush1.bf16.msra.mxu0 0
        %887 = vmatprep.subr.bf16.mxu0 0
        %888 = vmatpush1.bf16.msra.mxu0 0
        %889 = vmatprep.subr.bf16.mxu0 0
        %890 = vmatpush1.bf16.msra.mxu0 0
        %891 = vmatprep.subr.bf16.mxu0 0
        %892 = vmatpush1.bf16.msra.mxu0 0
        %893 = vmatprep.subr.bf16.mxu0 0
        %894 = vmatpush1.bf16.msra.mxu0 0
        %895 = vmatprep.subr.bf16.mxu0 0
        %896 = vmatpush1.bf16.msra.mxu0 0
        %897 = vmatprep.subr.bf16.mxu0 0
        %898 = vmatpush1.bf16.msra.mxu0 0
        %899 = vmatprep.mubr.bf16.mxu0 0
        %900 = vmatmul.mubr.bf16.gmra.mrb[0].mxu0 %v861
        %v901 = vpop.f32.mrb[0].mxu0
        %v902 = vadd.f32 0.0, %v901
        %v903 = vpop.f32.mrb[0].mxu0
        %v904 = vpop.f32.mrb[0].mxu0
        %v905 = vpop.f32.mrb[0].mxu0
        %906 = vdwg.mxu0
        %907 = vst.msk [vmem:[#allocation3] sm:$0xff] %vm799, %v902
        %909 = vrot.lane.b32.xlu0 %v794, 120
        %v910 = vpop.permute.xlu0 %909
        %911 = vrot.lane.b32.xlu0 %v795, 88
        %v912 = vpop.permute.xlu0 %911
        %v914 = vsel %vm799, %v910, 0
        %v917 = vsel %vm799, %v912, 0
        %919 = vmatprep.subr.bf16.mxu0 0
        %920 = vmatpush1.bf16.xpose.msra.mxu0 %v917
        %921 = vmatprep.subr.bf16.mxu0 0
        %922 = vmatpush1.bf16.xpose.msra.mxu0 0
        %923 = vmatprep.subr.bf16.mxu0 0
        %924 = vmatpush1.bf16.xpose.msra.mxu0 0
        %925 = vmatprep.subr.bf16.mxu0 0
        %926 = vmatpush1.bf16.xpose.msra.mxu0 0
        %927 = vmatprep.subr.bf16.mxu0 0
        %928 = vmatpush1.bf16.xpose.msra.mxu0 0
        %929 = vmatprep.subr.bf16.mxu0 0
        %930 = vmatpush1.bf16.xpose.msra.mxu0 0
        %931 = vmatprep.subr.bf16.mxu0 0
        %932 = vmatpush1.bf16.xpose.msra.mxu0 0
        %933 = vmatprep.subr.bf16.mxu0 0
        %934 = vmatpush1.bf16.xpose.msra.mxu0 0
        %935 = vmatprep.subr.bf16.mxu0 0
        %936 = vmatpush1.bf16.xpose.msra.mxu0 0
        %937 = vmatprep.subr.bf16.mxu0 0
        %938 = vmatpush1.bf16.xpose.msra.mxu0 0
        %939 = vmatprep.subr.bf16.mxu0 0
        %940 = vmatpush1.bf16.xpose.msra.mxu0 0
        %941 = vmatprep.subr.bf16.mxu0 0
        %942 = vmatpush1.bf16.xpose.msra.mxu0 0
        %943 = vmatprep.subr.bf16.mxu0 0
        %944 = vmatpush1.bf16.xpose.msra.mxu0 0
        %945 = vmatprep.subr.bf16.mxu0 0
        %946 = vmatpush1.bf16.xpose.msra.mxu0 0
        %947 = vmatprep.subr.bf16.mxu0 0
        %948 = vmatpush1.bf16.xpose.msra.mxu0 0
        %949 = vmatprep.subr.bf16.mxu0 0
        %950 = vmatpush1.bf16.xpose.msra.mxu0 0
        %951 = vmatprep.mubr.bf16.mxu0 0
        %952 = vmatmul.mubr.bf16.gmra.mrb[0].mxu0 %v914
        %v953 = vpop.f32.mrb[0].mxu0
        %v954 = vadd.f32 0.0, %v953
        %v955 = vpop.f32.mrb[0].mxu0
        %v956 = vpop.f32.mrb[0].mxu0
        %v957 = vpop.f32.mrb[0].mxu0
        %958 = vdwg.mxu0
        %v959 = vsel %vm799, %v954, -inf
        %960 = vmax.xlane.f32.xlu0 %v959
        %v961 = vpop.xlane.xlu0 %960
        %v962 = vsub.f32 %v954, %v961
        %v963 = vmul.f32 %v962, 1.442695
        %v964 = vpow.pop %v963
        %v965 = vsel %vm799, %v964, 0.0
        %966 = vadd.xlane.f32.xlu0 %v965
        %v967 = vpop.xlane.xlu0 %966
        %v968 = vrcp.pop %v967
        %v969 = vmul.f32 %v964, %v968
        %v970 = vpack.c.bf16 %v969, %v969
        %971 = vrot.lane.b32.xlu0 %v795, 56
        %v972 = vpop.permute.xlu0 %971
        %v974 = vsel %vm799, %v970, 0
        %v977 = vsel %vm863, %v972, 0
        %979 = vmatprep.subr.bf16.mxu0 0
        %980 = vmatpush1.bf16.msra.mxu0 %v977
        %981 = vmatprep.subr.bf16.mxu0 0
        %982 = vmatpush1.bf16.msra.mxu0 0
        %983 = vmatprep.subr.bf16.mxu0 0
        %984 = vmatpush1.bf16.msra.mxu0 0
        %985 = vmatprep.subr.bf16.mxu0 0
        %986 = vmatpush1.bf16.msra.mxu0 0
        %987 = vmatprep.subr.bf16.mxu0 0
        %988 = vmatpush1.bf16.msra.mxu0 0
        %989 = vmatprep.subr.bf16.mxu0 0
        %990 = vmatpush1.bf16.msra.mxu0 0
        %991 = vmatprep.subr.bf16.mxu0 0
        %992 = vmatpush1.bf16.msra.mxu0 0
        %993 = vmatprep.subr.bf16.mxu0 0
        %994 = vmatpush1.bf16.msra.mxu0 0
        %995 = vmatprep.subr.bf16.mxu0 0
        %996 = vmatpush1.bf16.msra.mxu0 0
        %997 = vmatprep.subr.bf16.mxu0 0
        %998 = vmatpush1.bf16.msra.mxu0 0
        %999 = vmatprep.subr.bf16.mxu0 0
        %1000 = vmatpush1.bf16.msra.mxu0 0
        %1001 = vmatprep.subr.bf16.mxu0 0
        %1002 = vmatpush1.bf16.msra.mxu0 0
        %1003 = vmatprep.subr.bf16.mxu0 0
        %1004 = vmatpush1.bf16.msra.mxu0 0
        %1005 = vmatprep.subr.bf16.mxu0 0
        %1006 = vmatpush1.bf16.msra.mxu0 0
        %1007 = vmatprep.subr.bf16.mxu0 0
        %1008 = vmatpush1.bf16.msra.mxu0 0
        %1009 = vmatprep.subr.bf16.mxu0 0
        %1010 = vmatpush1.bf16.msra.mxu0 0
        %1011 = vmatprep.mubr.bf16.mxu0 0
        %1012 = vmatmul.mubr.bf16.gmra.mrb[0].mxu0 %v974
        %v1013 = vpop.f32.mrb[0].mxu0
        %v1014 = vadd.f32 0.0, %v1013
        %v1015 = vpop.f32.mrb[0].mxu0
        %v1016 = vpop.f32.mrb[0].mxu0
        %v1017 = vpop.f32.mrb[0].mxu0
        %1018 = vdwg.mxu0
        %1020 = vrot.lane.b32.xlu0 %v1014, 8
        %v1021 = vpop.permute.xlu0 %1020
        %vm1023 = vcmask 130112
        %1024 = vst.msk [vmem:[#allocation3] sm:$0xff] %vm1023, %v1021
        %1025 = vrot.lane.b32.xlu0 %v794, 112
        %v1026 = vpop.permute.xlu0 %1025
        %1027 = vrot.lane.b32.xlu0 %v795, 80
        %v1028 = vpop.permute.xlu0 %1027
        %v1030 = vsel %vm799, %v1026, 0
        %v1033 = vsel %vm799, %v1028, 0
        %1035 = vmatprep.subr.bf16.mxu0 0
        %1036 = vmatpush1.bf16.xpose.msra.mxu0 %v1033
        %1037 = vmatprep.subr.bf16.mxu0 0
        %1038 = vmatpush1.bf16.xpose.msra.mxu0 0
        %1039 = vmatprep.subr.bf16.mxu0 0
        %1040 = vmatpush1.bf16.xpose.msra.mxu0 0
        %1041 = vmatprep.subr.bf16.mxu0 0
        %1042 = vmatpush1.bf16.xpose.msra.mxu0 0
        %1043 = vmatprep.subr.bf16.mxu0 0
        %1044 = vmatpush1.bf16.xpose.msra.mxu0 0
        %1045 = vmatprep.subr.bf16.mxu0 0
        %1046 = vmatpush1.bf16.xpose.msra.mxu0 0
        %1047 = vmatprep.subr.bf16.mxu0 0
        %1048 = vmatpush1.bf16.xpose.msra.mxu0 0
        %1049 = vmatprep.subr.bf16.mxu0 0
        %1050 = vmatpush1.bf16.xpose.msra.mxu0 0
        %1051 = vmatprep.subr.bf16.mxu0 0
        %1052 = vmatpush1.bf16.xpose.msra.mxu0 0
        %1053 = vmatprep.subr.bf16.mxu0 0
        %1054 = vmatpush1.bf16.xpose.msra.mxu0 0
        %1055 = vmatprep.subr.bf16.mxu0 0
        %1056 = vmatpush1.bf16.xpose.msra.mxu0 0
        %1057 = vmatprep.subr.bf16.mxu0 0
        %1058 = vmatpush1.bf16.xpose.msra.mxu0 0
        %1059 = vmatprep.subr.bf16.mxu0 0
        %1060 = vmatpush1.bf16.xpose.msra.mxu0 0
        %1061 = vmatprep.subr.bf16.mxu0 0
        %1062 = vmatpush1.bf16.xpose.msra.mxu0 0
        %1063 = vmatprep.subr.bf16.mxu0 0
        %1064 = vmatpush1.bf16.xpose.msra.mxu0 0
        %1065 = vmatprep.subr.bf16.mxu0 0
        %1066 = vmatpush1.bf16.xpose.msra.mxu0 0
        %1067 = vmatprep.mubr.bf16.mxu0 0
        %1068 = vmatmul.mubr.bf16.gmra.mrb[0].mxu0 %v1030
        %v1069 = vpop.f32.mrb[0].mxu0
        %v1070 = vadd.f32 0.0, %v1069
        %v1071 = vpop.f32.mrb[0].mxu0
        %v1072 = vpop.f32.mrb[0].mxu0
        %v1073 = vpop.f32.mrb[0].mxu0
        %1074 = vdwg.mxu0
        %v1075 = vsel %vm799, %v1070, -inf
        %1076 = vmax.xlane.f32.xlu0 %v1075
        %v1077 = vpop.xlane.xlu0 %1076
        %v1078 = vsub.f32 %v1070, %v1077
        %v1079 = vmul.f32 %v1078, 1.442695
        %v1080 = vpow.pop %v1079
        %v1081 = vsel %vm799, %v1080, 0.0
        %1082 = vadd.xlane.f32.xlu0 %v1081
        %v1083 = vpop.xlane.xlu0 %1082
        %v1084 = vrcp.pop %v1083
        %v1085 = vmul.f32 %v1080, %v1084
        %v1086 = vpack.c.bf16 %v1085, %v1085
        %1087 = vrot.lane.b32.xlu0 %v795, 48
        %v1088 = vpop.permute.xlu0 %1087
        %v1090 = vsel %vm799, %v1086, 0
        %v1093 = vsel %vm863, %v1088, 0
        %1095 = vmatprep.subr.bf16.mxu0 0
        %1096 = vmatpush1.bf16.msra.mxu0 %v1093
        %1097 = vmatprep.subr.bf16.mxu0 0
        %1098 = vmatpush1.bf16.msra.mxu0 0
        %1099 = vmatprep.subr.bf16.mxu0 0
        %1100 = vmatpush1.bf16.msra.mxu0 0
        %1101 = vmatprep.subr.bf16.mxu0 0
        %1102 = vmatpush1.bf16.msra.mxu0 0
        %1103 = vmatprep.subr.bf16.mxu0 0
        %1104 = vmatpush1.bf16.msra.mxu0 0
        %1105 = vmatprep.subr.bf16.mxu0 0
        %1106 = vmatpush1.bf16.msra.mxu0 0
        %1107 = vmatprep.subr.bf16.mxu0 0
        %1108 = vmatpush1.bf16.msra.mxu0 0
        %1109 = vmatprep.subr.bf16.mxu0 0
        %1110 = vmatpush1.bf16.msra.mxu0 0
        %1111 = vmatprep.subr.bf16.mxu0 0
        %1112 = vmatpush1.bf16.msra.mxu0 0
        %1113 = vmatprep.subr.bf16.mxu0 0
        %1114 = vmatpush1.bf16.msra.mxu0 0
        %1115 = vmatprep.subr.bf16.mxu0 0
        %1116 = vmatpush1.bf16.msra.mxu0 0
        %1117 = vmatprep.subr.bf16.mxu0 0
        %1118 = vmatpush1.bf16.msra.mxu0 0
        %1119 = vmatprep.subr.bf16.mxu0 0
        %1120 = vmatpush1.bf16.msra.mxu0 0
        %1121 = vmatprep.subr.bf16.mxu0 0
        %1122 = vmatpush1.bf16.msra.mxu0 0
        %1123 = vmatprep.subr.bf16.mxu0 0
        %1124 = vmatpush1.bf16.msra.mxu0 0
        %1125 = vmatprep.subr.bf16.mxu0 0
        %1126 = vmatpush1.bf16.msra.mxu0 0
        %1127 = vmatprep.mubr.bf16.mxu0 0
        %1128 = vmatmul.mubr.bf16.gmra.mrb[0].mxu0 %v1090
        %v1129 = vpop.f32.mrb[0].mxu0
        %v1130 = vadd.f32 0.0, %v1129
        %v1131 = vpop.f32.mrb[0].mxu0
        %v1132 = vpop.f32.mrb[0].mxu0
        %v1133 = vpop.f32.mrb[0].mxu0
        %1134 = vdwg.mxu0
        %1136 = vrot.lane.b32.xlu0 %v1130, 16
        %v1137 = vpop.permute.xlu0 %1136
        %vm1139 = vcmask 195712
        %1140 = vst.msk [vmem:[#allocation3] sm:$0xff] %vm1139, %v1137
        %1141 = vrot.lane.b32.xlu0 %v794, 104
        %v1142 = vpop.permute.xlu0 %1141
        %1143 = vrot.lane.b32.xlu0 %v795, 72
        %v1144 = vpop.permute.xlu0 %1143
        %v1146 = vsel %vm799, %v1142, 0
        %v1149 = vsel %vm799, %v1144, 0
        %1151 = vmatprep.subr.bf16.mxu0 0
        %1152 = vmatpush1.bf16.xpose.msra.mxu0 %v1149
        %1153 = vmatprep.subr.bf16.mxu0 0
        %1154 = vmatpush1.bf16.xpose.msra.mxu0 0
        %1155 = vmatprep.subr.bf16.mxu0 0
        %1156 = vmatpush1.bf16.xpose.msra.mxu0 0
        %1157 = vmatprep.subr.bf16.mxu0 0
        %1158 = vmatpush1.bf16.xpose.msra.mxu0 0
        %1159 = vmatprep.subr.bf16.mxu0 0
        %1160 = vmatpush1.bf16.xpose.msra.mxu0 0
        %1161 = vmatprep.subr.bf16.mxu0 0
        %1162 = vmatpush1.bf16.xpose.msra.mxu0 0
        %1163 = vmatprep.subr.bf16.mxu0 0
        %1164 = vmatpush1.bf16.xpose.msra.mxu0 0
        %1165 = vmatprep.subr.bf16.mxu0 0
        %1166 = vmatpush1.bf16.xpose.msra.mxu0 0
        %1167 = vmatprep.subr.bf16.mxu0 0
        %1168 = vmatpush1.bf16.xpose.msra.mxu0 0
        %1169 = vmatprep.subr.bf16.mxu0 0
        %1170 = vmatpush1.bf16.xpose.msra.mxu0 0
        %1171 = vmatprep.subr.bf16.mxu0 0
        %1172 = vmatpush1.bf16.xpose.msra.mxu0 0
        %1173 = vmatprep.subr.bf16.mxu0 0
        %1174 = vmatpush1.bf16.xpose.msra.mxu0 0
        %1175 = vmatprep.subr.bf16.mxu0 0
        %1176 = vmatpush1.bf16.xpose.msra.mxu0 0
        %1177 = vmatprep.subr.bf16.mxu0 0
        %1178 = vmatpush1.bf16.xpose.msra.mxu0 0
        %1179 = vmatprep.subr.bf16.mxu0 0
        %1180 = vmatpush1.bf16.xpose.msra.mxu0 0
        %1181 = vmatprep.subr.bf16.mxu0 0
        %1182 = vmatpush1.bf16.xpose.msra.mxu0 0
        %1183 = vmatprep.mubr.bf16.mxu0 0
        %1184 = vmatmul.mubr.bf16.gmra.mrb[0].mxu0 %v1146
        %v1185 = vpop.f32.mrb[0].mxu0
        %v1186 = vadd.f32 0.0, %v1185
        %v1187 = vpop.f32.mrb[0].mxu0
        %v1188 = vpop.f32.mrb[0].mxu0
        %v1189 = vpop.f32.mrb[0].mxu0
        %1190 = vdwg.mxu0
        %v1191 = vsel %vm799, %v1186, -inf
        %1192 = vmax.xlane.f32.xlu0 %v1191
        %v1193 = vpop.xlane.xlu0 %1192
        %v1194 = vsub.f32 %v1186, %v1193
        %v1195 = vmul.f32 %v1194, 1.442695
        %v1196 = vpow.pop %v1195
        %v1197 = vsel %vm799, %v1196, 0.0
        %1198 = vadd.xlane.f32.xlu0 %v1197
        %v1199 = vpop.xlane.xlu0 %1198
        %v1200 = vrcp.pop %v1199
        %v1201 = vmul.f32 %v1196, %v1200
        %v1202 = vpack.c.bf16 %v1201, %v1201
        %1203 = vrot.lane.b32.xlu0 %v795, 40
        %v1204 = vpop.permute.xlu0 %1203
        %v1206 = vsel %vm799, %v1202, 0
        %v1209 = vsel %vm863, %v1204, 0
        %1211 = vmatprep.subr.bf16.mxu0 0
        %1212 = vmatpush1.bf16.msra.mxu0 %v1209
        %1213 = vmatprep.subr.bf16.mxu0 0
        %1214 = vmatpush1.bf16.msra.mxu0 0
        %1215 = vmatprep.subr.bf16.mxu0 0
        %1216 = vmatpush1.bf16.msra.mxu0 0
        %1217 = vmatprep.subr.bf16.mxu0 0
        %1218 = vmatpush1.bf16.msra.mxu0 0
        %1219 = vmatprep.subr.bf16.mxu0 0
        %1220 = vmatpush1.bf16.msra.mxu0 0
        %1221 = vmatprep.subr.bf16.mxu0 0
        %1222 = vmatpush1.bf16.msra.mxu0 0
        %1223 = vmatprep.subr.bf16.mxu0 0
        %1224 = vmatpush1.bf16.msra.mxu0 0
        %1225 = vmatprep.subr.bf16.mxu0 0
        %1226 = vmatpush1.bf16.msra.mxu0 0
        %1227 = vmatprep.subr.bf16.mxu0 0
        %1228 = vmatpush1.bf16.msra.mxu0 0
        %1229 = vmatprep.subr.bf16.mxu0 0
        %1230 = vmatpush1.bf16.msra.mxu0 0
        %1231 = vmatprep.subr.bf16.mxu0 0
        %1232 = vmatpush1.bf16.msra.mxu0 0
        %1233 = vmatprep.subr.bf16.mxu0 0
        %1234 = vmatpush1.bf16.msra.mxu0 0
        %1235 = vmatprep.subr.bf16.mxu0 0
        %1236 = vmatpush1.bf16.msra.mxu0 0
        %1237 = vmatprep.subr.bf16.mxu0 0
        %1238 = vmatpush1.bf16.msra.mxu0 0
        %1239 = vmatprep.subr.bf16.mxu0 0
        %1240 = vmatpush1.bf16.msra.mxu0 0
        %1241 = vmatprep.subr.bf16.mxu0 0
        %1242 = vmatpush1.bf16.msra.mxu0 0
        %1243 = vmatprep.mubr.bf16.mxu0 0
        %1244 = vmatmul.mubr.bf16.gmra.mrb[0].mxu0 %v1206
        %v1245 = vpop.f32.mrb[0].mxu0
        %v1246 = vadd.f32 0.0, %v1245
        %v1247 = vpop.f32.mrb[0].mxu0
        %v1248 = vpop.f32.mrb[0].mxu0
        %v1249 = vpop.f32.mrb[0].mxu0
        %1250 = vdwg.mxu0
        %1252 = vrot.lane.b32.xlu0 %v1246, 24
        %v1253 = vpop.permute.xlu0 %1252
        %vm1255 = vcmask 261312
        %1256 = vst.msk [vmem:[#allocation3] sm:$0xff] %vm1255, %v1253
        %v1257 = vld [vmem:[#allocation3] sm:$0xff]
        %v1258 = vpack.c.bf16 %v1257, %v1257
        %v1259 = vld [vmem:[%s679] sm:$0xf]
        %v1260 = vld [vmem:[%s679 + $0x4] sm:$0xf]
        %v1261 = vld [vmem:[%s679 + $0x8] sm:$0xf]
        %v1262 = vld [vmem:[%s679 + $0xc] sm:$0xf]
        %v1263 = vld [vmem:[%s554] sm:$0x1]
        %v1265 = vlaneseq
        %v1266 = vshrl.u32 %v1265, 7
        %v1267 = vsub.s32 0, %v1266
        %v1268 = vrot.slane %v1263, %v1267
        %v1274 = vunpack.c.l.b16 %v1259
        %v1275 = vunpack.c.l.b16 %v1260
        %v1276 = vunpack.c.l.b16 %v1261
        %v1277 = vunpack.c.l.b16 %v1262
        %v1278 = vpack.c.b16 %v1275, %v1274
        %v1279 = vpack.c.b16 %v1277, %v1276
        %v1283 = vsel %vm702, %v1258, 0
        %1285 = vmatprep.subr.bf16.mxu0 0
        %1286 = vmatpush1.bf16.msra.mxu0 %v1278
        %1287 = vmatprep.subr.bf16.mxu0 0
        %1288 = vmatpush1.bf16.msra.mxu0 %v1279
        %1289 = vmatprep.subr.bf16.mxu0 0
        %1290 = vmatpush1.bf16.msra.mxu0 0
        %1291 = vmatprep.subr.bf16.mxu0 0
        %1292 = vmatpush1.bf16.msra.mxu0 0
        %1293 = vmatprep.subr.bf16.mxu0 0
        %1294 = vmatpush1.bf16.msra.mxu0 0
        %1295 = vmatprep.subr.bf16.mxu0 0
        %1296 = vmatpush1.bf16.msra.mxu0 0
        %1297 = vmatprep.subr.bf16.mxu0 0
        %1298 = vmatpush1.bf16.msra.mxu0 0
        %1299 = vmatprep.subr.bf16.mxu0 0
        %1300 = vmatpush1.bf16.msra.mxu0 0
        %1301 = vmatprep.subr.bf16.mxu0 0
        %1302 = vmatpush1.bf16.msra.mxu0 0
        %1303 = vmatprep.subr.bf16.mxu0 0
        %1304 = vmatpush1.bf16.msra.mxu0 0
        %1305 = vmatprep.subr.bf16.mxu0 0
        %1306 = vmatpush1.bf16.msra.mxu0 0
        %1307 = vmatprep.subr.bf16.mxu0 0
        %1308 = vmatpush1.bf16.msra.mxu0 0
        %1309 = vmatprep.subr.bf16.mxu0 0
        %1310 = vmatpush1.bf16.msra.mxu0 0
        %1311 = vmatprep.subr.bf16.mxu0 0
        %1312 = vmatpush1.bf16.msra.mxu0 0
        %1313 = vmatprep.subr.bf16.mxu0 0
        %1314 = vmatpush1.bf16.msra.mxu0 0
        %1315 = vmatprep.subr.bf16.mxu0 0
        %1316 = vmatpush1.bf16.msra.mxu0 0
        %1317 = vmatprep.mubr.bf16.mxu0 0
        %1318 = vmatmul.mubr.bf16.gmra.mrb[0].mxu0 %v1283
        %v1319 = vpop.f32.mrb[0].mxu0
        %v1320 = vadd.f32 %v1268, %v1319
        %v1321 = vpop.f32.mrb[0].mxu0
        %v1322 = vpop.f32.mrb[0].mxu0
        %v1323 = vpop.f32.mrb[0].mxu0
        %1324 = vdwg.mxu0
        %v1325 = vsel %vm702, %v1320, 0.0
        %1326 = vadd.xlane.f32.xlu0 %v1325
        %v1327 = vpop.xlane.xlu0 %1326
        %v1328 = vmul.f32 %v1327, %v706
        %v1329 = vsub.f32 %v1320, %v1328
        %v1330 = vmul.f32 %v1329, %v1329
        %v1331 = vsel %vm702, %v1330, 0.0
        %1332 = vadd.xlane.f32.xlu0 %v1331
        %v1333 = vpop.xlane.xlu0 %1332
        %v1334 = vmul.f32 %v1333, %v706
        %v1335 = vadd.f32 %v1334, 1e-05
        %v1336 = vrsqrt.pop %v1335
        %v1337 = vmul.f32 %v1329, %v1336
        %v1338 = vld [vmem:[%s562] sm:$0x1]
        %v1340 = vlaneseq
        %v1341 = vshrl.u32 %v1340, 7
        %v1342 = vsub.s32 0, %v1341
        %v1343 = vrot.slane %v1338, %v1342
        %v1345 = vmul.f32 %v1337, %v1343
        %v1346 = vld [vmem:[%s570] sm:$0x1]
        %v1348 = vlaneseq
        %v1349 = vshrl.u32 %v1348, 7
        %v1350 = vsub.s32 0, %v1349
        %v1351 = vrot.slane %v1346, %v1350
        %v1353 = vadd.f32 %v1345, %v1351
        %v1354 = vpack.c.bf16 %v1353, %v1353
        %v1355 = vld [vmem:[%s684] sm:$0xf]
        %v1356 = vld [vmem:[%s684 + $0x4] sm:$0xf]
        %v1357 = vld [vmem:[%s684 + $0x8] sm:$0xf]
        %v1358 = vld [vmem:[%s684 + $0xc] sm:$0xf]
        %v1359 = vld [vmem:[%s578] sm:$0x1]
        %v1361 = vlaneseq
        %v1362 = vshrl.u32 %v1361, 7
        %v1363 = vsub.s32 0, %v1362
        %v1364 = vrot.slane %v1359, %v1363
        %v1370 = vunpack.c.l.b16 %v1355
        %v1371 = vunpack.c.l.b16 %v1356
        %v1372 = vunpack.c.l.b16 %v1357
        %v1373 = vunpack.c.l.b16 %v1358
        %v1374 = vpack.c.b16 %v1371, %v1370
        %v1375 = vpack.c.b16 %v1373, %v1372
        %v1379 = vsel %vm702, %v1354, 0
        %1381 = vmatprep.subr.bf16.mxu0 0
        %1382 = vmatpush1.bf16.msra.mxu0 %v1374
        %1383 = vmatprep.subr.bf16.mxu0 0
        %1384 = vmatpush1.bf16.msra.mxu0 %v1375
        %1385 = vmatprep.subr.bf16.mxu0 0
        %1386 = vmatpush1.bf16.msra.mxu0 0
        %1387 = vmatprep.subr.bf16.mxu0 0
        %1388 = vmatpush1.bf16.msra.mxu0 0
        %1389 = vmatprep.subr.bf16.mxu0 0
        %1390 = vmatpush1.bf16.msra.mxu0 0
        %1391 = vmatprep.subr.bf16.mxu0 0
        %1392 = vmatpush1.bf16.msra.mxu0 0
        %1393 = vmatprep.subr.bf16.mxu0 0
        %1394 = vmatpush1.bf16.msra.mxu0 0
        %1395 = vmatprep.subr.bf16.mxu0 0
        %1396 = vmatpush1.bf16.msra.mxu0 0
        %1397 = vmatprep.subr.bf16.mxu0 0
        %1398 = vmatpush1.bf16.msra.mxu0 0
        %1399 = vmatprep.subr.bf16.mxu0 0
        %1400 = vmatpush1.bf16.msra.mxu0 0
        %1401 = vmatprep.subr.bf16.mxu0 0
        %1402 = vmatpush1.bf16.msra.mxu0 0
        %1403 = vmatprep.subr.bf16.mxu0 0
        %1404 = vmatpush1.bf16.msra.mxu0 0
        %1405 = vmatprep.subr.bf16.mxu0 0
        %1406 = vmatpush1.bf16.msra.mxu0 0
        %1407 = vmatprep.subr.bf16.mxu0 0
        %1408 = vmatpush1.bf16.msra.mxu0 0
        %1409 = vmatprep.subr.bf16.mxu0 0
        %1410 = vmatpush1.bf16.msra.mxu0 0
        %1411 = vmatprep.subr.bf16.mxu0 0
        %1412 = vmatpush1.bf16.msra.mxu0 0
        %1413 = vmatprep.mubr.bf16.mxu0 0
        %1414 = vmatmul.mubr.bf16.gmra.mrb[0].mxu0 %v1379
        %v1415 = vpop.f32.mrb[0].mxu0
        %v1416 = vadd.f32 %v1364, %v1415
        %v1417 = vpop.f32.mrb[0].mxu0
        %v1418 = vpop.f32.mrb[0].mxu0
        %v1419 = vpop.f32.mrb[0].mxu0
        %1420 = vdwg.mxu0
        %v1421 = vmax.f32 %v1416, 0.0
        %v1422 = vpack.c.bf16 %v1421, %v1421
        %v1423 = vld [vmem:[%s689] sm:$0xf]
        %v1424 = vld [vmem:[%s689 + $0x4] sm:$0xf]
        %v1425 = vld [vmem:[%s689 + $0x8] sm:$0xf]
        %v1426 = vld [vmem:[%s689 + $0xc] sm:$0xf]
        %v1427 = vld [vmem:[%s689 + $0x10] sm:$0xf]
        %v1428 = vld [vmem:[%s689 + $0x14] sm:$0xf]
        %v1429 = vld [vmem:[%s689 + $0x18] sm:$0xf]
        %v1430 = vld [vmem:[%s689 + $0x1c] sm:$0xf]
        %v1431 = vld [vmem:[%s692] sm:$0x1]
        %v1433 = vlaneseq
        %v1434 = vshrl.u32 %v1433, 7
        %v1435 = vsub.s32 0, %v1434
        %v1436 = vrot.slane %v1431, %v1435
        %v1446 = vunpack.c.l.b16 %v1423
        %v1447 = vunpack.c.l.b16 %v1424
        %v1448 = vunpack.c.l.b16 %v1425
        %v1449 = vunpack.c.l.b16 %v1426
        %v1450 = vunpack.c.l.b16 %v1427
        %v1451 = vunpack.c.l.b16 %v1428
        %v1452 = vunpack.c.l.b16 %v1429
        %v1453 = vunpack.c.l.b16 %v1430
        %v1454 = vpack.c.b16 %v1447, %v1446
        %v1455 = vpack.c.b16 %v1449, %v1448
        %v1456 = vpack.c.b16 %v1451, %v1450
        %v1457 = vpack.c.b16 %v1453, %v1452
        %vm1462 = vcmask 523264
        %v1464 = vsel %vm1462, %v1422, 0
        %1466 = vmatprep.subr.bf16.mxu0 0
        %1467 = vmatpush1.bf16.msra.mxu0 %v1454
        %1468 = vmatprep.subr.bf16.mxu0 0
        %1469 = vmatpush1.bf16.msra.mxu0 %v1455
        %1470 = vmatprep.subr.bf16.mxu0 0
        %1471 = vmatpush1.bf16.msra.mxu0 %v1456
        %1472 = vmatprep.subr.bf16.mxu0 0
        %1473 = vmatpush1.bf16.msra.mxu0 %v1457
        %1474 = vmatprep.subr.bf16.mxu0 0
        %1475 = vmatpush1.bf16.msra.mxu0 0
        %1476 = vmatprep.subr.bf16.mxu0 0
        %1477 = vmatpush1.bf16.msra.mxu0 0
        %1478 = vmatprep.subr.bf16.mxu0 0
        %1479 = vmatpush1.bf16.msra.mxu0 0
        %1480 = vmatprep.subr.bf16.mxu0 0
        %1481 = vmatpush1.bf16.msra.mxu0 0
        %1482 = vmatprep.subr.bf16.mxu0 0
        %1483 = vmatpush1.bf16.msra.mxu0 0
        %1484 = vmatprep.subr.bf16.mxu0 0
        %1485 = vmatpush1.bf16.msra.mxu0 0
        %1486 = vmatprep.subr.bf16.mxu0 0
        %1487 = vmatpush1.bf16.msra.mxu0 0
        %1488 = vmatprep.subr.bf16.mxu0 0
        %1489 = vmatpush1.bf16.msra.mxu0 0
        %1490 = vmatprep.subr.bf16.mxu0 0
        %1491 = vmatpush1.bf16.msra.mxu0 0
        %1492 = vmatprep.subr.bf16.mxu0 0
        %1493 = vmatpush1.bf16.msra.mxu0 0
        %1494 = vmatprep.subr.bf16.mxu0 0
        %1495 = vmatpush1.bf16.msra.mxu0 0
        %1496 = vmatprep.subr.bf16.mxu0 0
        %1497 = vmatpush1.bf16.msra.mxu0 0
        %1498 = vmatprep.mubr.bf16.mxu0 0
        %1499 = vmatmul.mubr.bf16.gmra.mrb[0].mxu0 %v1464
        %v1500 = vpop.f32.mrb[0].mxu0
        %v1501 = vadd.f32 %v1436, %v1500
        %v1502 = vpop.f32.mrb[0].mxu0
        %v1503 = vpop.f32.mrb[0].mxu0
        %v1504 = vpop.f32.mrb[0].mxu0
        %1505 = vdwg.mxu0
        %v1506 = vadd.f32 %v1501, %v1320
        %1507 = vst.msk [vmem:[#allocation2] sm:$0xff] %vm702, %v1506
        %p1508 = scmp.eq.s32.totalorder %s40, 1
        // Predicated region
        $region93: #{tpu_custom_call.1} parent=67 // pred_check
          %p1509 = pneg %p1508
        $region94: #{tpu_custom_call.1} parent=67 // pred_check_branch
          %1511 = sbr.rel (%p1509) target = $region96
        $region95: #{tpu_custom_call.1} parent=67 // pred_region
          %1512 = vst.msk [vmem:[%s663] sm:$0xff] %vm702, %v1506
        $region96: #{tpu_custom_call.1} parent=67 // pred_fallthru
          _
        %s1513 = sand.u32 %s367, 1
        %s1514 = scalar_lea.sflag [#allocation6], %s1513
        %s1515 = sand.u32 %s367, 1
        %s1516 = smul.addr %s1515, 8
        %s1517 = scalar_lea.vmem [#allocation13], %s1516
        // Predicated region
        $region97: #{tpu_custom_call.1} parent=67 // pred_check
          %p1518 = pneg %p377
        $region98: #{tpu_custom_call.1} parent=67 // pred_check_branch
          %1520 = sbr.rel (%p1518) target = $region100
        $region99: #{tpu_custom_call.1} parent=67 // pred_region
          %s1522 = ssub.s32 128, 128
          %1523 = vsyncadd %s1514, %s1522
          %s1524 = smul.addr %s39, 128
          %s1525 = scalar_lea.hbm %s12, %s1524
          %s1527 = sshll.u32 %s1517, 4
          %s1528 = int_to_ptr.vmem [resolvable:$true] %s1527
          %1530 = dma.vmem_to_hbm [thread:$0]  %s1528, 128, %s1525, %s1514
        $region100: #{tpu_custom_call.1} parent=67 // pred_fallthru
          _
      $region68: #{tpu_custom_call.1} parent=5 // pred_fallthru
        _
      %p1531 = scmp.le.s32.totalorder 2, %s30
      // Predicated region
      $region101: #{tpu_custom_call.1} parent=5 // pred_check
        %p1532 = pneg %p1531
      $region102: #{tpu_custom_call.1} parent=5 // pred_check_branch
        %1534 = sbr.rel (%p1532) target = $region104
      $region103: #{tpu_custom_call.1} parent=5 // pred_region
        %s1535 = ssub.s32 %s30, 2
        // Predicated region
        $region105: #{tpu_custom_call.1} parent=103 // pred_check
          %p1536 = pneg %p383
        $region106: #{tpu_custom_call.1} parent=103 // pred_check_branch
          %1538 = sbr.rel (%p1536) target = $region108
        $region107: #{tpu_custom_call.1} parent=103 // pred_region
          %s1539 = sand.u32 %s368, 1
          %s1540 = scalar_lea.sflag [#allocation6], %s1539
          %s1541 = sand.u32 %s368, 1
          %s1542 = smul.addr %s1541, 8
          %s1543 = scalar_lea.vmem [#allocation13], %s1542
          %1544 = dma.done %s1540, 128
        $region108: #{tpu_custom_call.1} parent=103 // pred_fallthru
          _
      $region104: #{tpu_custom_call.1} parent=5 // pred_fallthru
        _
    $region6: #{tpu_custom_call.1} parent=1 // loop_footer
      %s34 = sadd.s32 1, %s30
    $region7: #{tpu_custom_call.1} parent=1 // loop_footer_branch
      %29 = sbr.rel target = $region3
    $region8: #{tpu_custom_call.1} parent=1 // loop_exit
      _
    %1545 = vsyncpa [#allocation5], 1
    %s1546 = scalar_lea.sflag [#allocation5], 1
    %1547 = vsyncpa %s1546, 1
    %1548 = vsyncpa [#allocation8], 1
    %s1549 = scalar_lea.sflag [#allocation8], 1
    %1550 = vsyncpa %s1549, 1
    %1551 = vsyncpa [#allocation11], 1
    %s1552 = scalar_lea.sflag [#allocation11], 1
    %1553 = vsyncpa %s1552, 1
    %1554 = vsyncpa [#allocation6], 1
    %s1555 = scalar_lea.sflag [#allocation6], 1
    %1556 = vsyncpa %s1555, 1

</llo_original>
